<compile_context>
chip_gen: v7x
topology: tpu7x:2x2x1
jax: 0.10.0
libtpu: 0.0.40
codegen_flags: <defaults>
</compile_context>

<pallas_src>
import functools

import numpy as np
import jax
import jax.numpy as jnp
from jax import lax
from jax.experimental import pallas as pl
from jax.experimental.pallas import tpu as pltpu


def _group_kernel(xyz_t_ref, rhs_ref, feat_ref, center_ref, *,
                  num_group, group_size, n_valid):
    G, K = num_group, group_size
    xt = xyz_t_ref[...].astype(jnp.float32)        # (3, Np)   N on lanes
    rhs = rhs_ref[...].astype(jnp.float32)         # (Np, 6)   fused [xyz | color] gather table
    Np = xt.shape[1]

    xt0 = xt[0:1, :]
    xt1 = xt[1:2, :]
    xt2 = xt[2:3, :]
    n_lane = lax.broadcasted_iota(jnp.int32, (1, Np), 1)    # (1, Np)
    g_sub = lax.broadcasted_iota(jnp.int32, (G, 1), 0)      # (G, 1)
    gn_iota = lax.broadcasted_iota(jnp.int32, (G, Np), 1)   # (G, Np)

    # ---- furthest point sampling (first sample = point 0, lowest-index
    #      tie-break on the argmax; same semantics as pointnet2 FPS) --------
    def fps_body(i, carry):
        mind, far, cent6 = carry                                 # (1,Np) f32, (1,1) i32, (G,6) f32
        sel = (n_lane == far).astype(jnp.float32)                # (1, Np) one-hot
        pt6 = jnp.dot(sel, rhs,
                      preferred_element_type=jnp.float32)        # (1, 6) exact MXU gather
        cent6 = jnp.where(g_sub == i, pt6, cent6)                # write row i of centers
        dx = xt0 - pt6[:, 0:1]                                   # (1, Np) pure VPU
        dy = xt1 - pt6[:, 1:2]
        dz = xt2 - pt6[:, 2:3]
        d = dx * dx + dy * dy + dz * dz                          # (1, Np)
        mind = jnp.minimum(mind, d)
        maxv = jnp.max(mind, axis=1, keepdims=True)              # (1, 1)
        cand = jnp.where(mind >= maxv, n_lane, Np)               # (1, Np)
        far = jnp.min(cand, axis=1, keepdims=True)               # (1, 1) i32, lowest-index argmax
        return mind, far, cent6

    # Padded lanes start at -1 so they can never become the farthest point.
    mind0 = jnp.where(n_lane < n_valid, jnp.float32(1e10), jnp.float32(-1.0))
    far0 = jnp.zeros((1, 1), jnp.int32)
    cent6_0 = jnp.zeros((G, 6), jnp.float32)
    _, _, cent6 = lax.fori_loop(0, G, fps_body, (mind0, far0, cent6_0))

    centers = cent6[:, 0:3]                                      # (G, 3)
    center_ref[...] = centers
    # Offsets for the fused [xyz | color] rows: center xyz, leave color alone.
    centers6 = jnp.concatenate([centers, jnp.zeros((G, 3), jnp.float32)], axis=-1)

    # ---- kNN distances, direct (c - x)^2 form (bit-parity with reference) --
    d2 = jnp.zeros((G, Np), jnp.float32)
    for c in range(3):                                           # static 3-iter loop
        dc = centers[:, c:c + 1] - xt[c:c + 1, :]                # (G, Np)
        d2 = d2 + dc * dc

    # ---- iteratively pick the K closest points per center ------------------
    # torch.topk(..., largest=False, sorted=False) is an unordered k-NN set;
    # we emit it in ascending-distance order (lowest-index tie-break).
    def knn_body(k, dcur):
        minv = jnp.min(dcur, axis=1, keepdims=True)              # (G, 1) lane reduce
        cand = jnp.where(dcur <= minv, gn_iota, Np)              # (G, Np)
        idx = jnp.min(cand, axis=1, keepdims=True)               # (G, 1)
        sel = gn_iota == idx                                     # (G, Np) one-hot mask
        row = jnp.dot(sel.astype(jnp.float32), rhs,
                      preferred_element_type=jnp.float32)        # (G, 6) exact MXU gather
        feat_ref[k] = row - centers6                             # centered xyz | raw color
        return jnp.where(sel, jnp.float32(1e30), dcur)           # poison selected point

    # Fully unrolled: exposes the matmul/store of step k to the scheduler so it
    # overlaps with step k+1's reductions.
    lax.fori_loop(0, K, knn_body, d2, unroll=True)


def group_forward(xyz, color, num_group, group_size):
    """xyz, color: [B, N, 3] f32 -> (neighborhood [B,G,K,3], center [B,G,3], features [B,G,K,6])."""
    B, N, C = xyz.shape
    assert C == 3 and color.shape == xyz.shape
    assert group_size <= N and num_group <= N

    xyz = xyz.astype(jnp.float32)
    color = color.astype(jnp.float32)

    # Pad the point axis to a lane-aligned multiple of 128. Padded points get a
    # coordinate strictly farther from every real center than any real point,
    # so they never enter a kNN set; FPS handles them via the -1 sentinel.
    n_pad = ((N + 127) // 128) * 128
    if n_pad != N:
        big = 4.0 * jnp.max(jnp.abs(xyz)) + 1.0
        pad_xyz = jnp.full((B, n_pad - N, 3), big, jnp.float32)
        pad_col = jnp.zeros((B, n_pad - N, 3), jnp.float32)
        xyz_p = jnp.concatenate([xyz, pad_xyz], axis=1)
        col_p = jnp.concatenate([color, pad_col], axis=1)
    else:
        xyz_p, col_p = xyz, color

    xyz_t = jnp.transpose(xyz_p, (0, 2, 1))            # (B, 3, Np): N on the lane axis
    rhs = jnp.concatenate([xyz_p, col_p], axis=-1)     # (B, Np, 6): fused gather RHS

    kernel = functools.partial(_group_kernel, num_group=num_group,
                               group_size=group_size, n_valid=N)
    out_shape = (
        jax.ShapeDtypeStruct((B, group_size, num_group, 6), jnp.float32),
        jax.ShapeDtypeStruct((B, num_group, 3), jnp.float32),
    )
    grid_spec = pl.GridSpec(
        grid=(B,),
        in_specs=[
            pl.BlockSpec((None, 3, n_pad), lambda b: (b, 0, 0)),
            pl.BlockSpec((None, n_pad, 6), lambda b: (b, 0, 0)),
        ],
        out_specs=[
            pl.BlockSpec((None, group_size, num_group, 6), lambda b: (b, 0, 0, 0)),
            pl.BlockSpec((None, num_group, 3), lambda b: (b, 0, 0)),
        ],
    )
    feat_kg6, center = pl.pallas_call(
        kernel,
        out_shape=out_shape,
        grid_spec=grid_spec,
        compiler_params=pltpu.CompilerParams(dimension_semantics=("parallel",)),
    )(xyz_t, rhs)

    # Layout plumbing outside the kernel: (B, K, G, 6) -> (B, G, K, 6).
    features = jnp.transpose(feat_kg6, (0, 2, 1, 3))
    neighborhood = features[..., 0:3]
    return neighborhood, center, features


def reference_group(xyz, color, num_group, group_size):
    """Pure numpy reference with identical FPS / tie-breaking semantics."""
    xyz = np.asarray(xyz, np.float32)
    color = np.asarray(color, np.float32)
    B, N, _ = xyz.shape
    nbs, cts, fts = [], [], []
    for b in range(B):
        x, c = xyz[b], color[b]
        mind = np.full((N,), 1e10, np.float32)
        far = 0
        centers = np.zeros((num_group, 3), np.float32)
        for i in range(num_group):
            p = x[far]
            centers[i] = p
            d = np.sum((x - p) ** 2, axis=-1)
            mind = np.minimum(mind, d)
            far = int(np.argmax(mind))
        d2 = np.sum((centers[:, None, :] - x[None, :, :]) ** 2, axis=-1)
        idx = np.argsort(d2, axis=-1, kind="stable")[:, :group_size]
        nb = x[idx] - centers[:, None, :]
        nbc = c[idx]
        nbs.append(nb)
        cts.append(centers)
        fts.append(np.concatenate([nb, nbc], axis=-1))
    return np.stack(nbs), np.stack(cts), np.stack(fts)


if __name__ == "__main__":
    key = jax.random.PRNGKey(0)
    k1, k2 = jax.random.split(key)
    B, N = 2, 64
    num_group, group_size = 8, 8

    xyz = jax.random.normal(k1, (B, N, 3), dtype=jnp.float32)
    color = jax.random.uniform(k2, (B, N, 3), dtype=jnp.float32)

    neighborhood, center, features = group_forward(xyz, color, num_group, group_size)
    jax.block_until_ready(neighborhood)
    jax.block_until_ready(center)
    jax.block_until_ready(features)

    nb_ref, c_ref, f_ref = reference_group(xyz, color, num_group, group_size)
    assert neighborhood.shape == (B, num_group, group_size, 3)
    assert center.shape == (B, num_group, 3)
    assert features.shape == (B, num_group, group_size, 6)
    assert np.allclose(np.asarray(center), c_ref, atol=1e-5)
    assert np.allclose(np.asarray(neighborhood), nb_ref, atol=1e-5)
    assert np.allclose(np.asarray(features), f_ref, atol=1e-5)

    print("KERNEL_OK")
</pallas_src>

<mosaic_0001>
module attributes {stable_mosaic.version = 11 : i64} {
  func.func @_group_kernel(%arg0: i32, %arg1: memref<1x3x128xf32, #tpu.memory_space<vmem>>, %arg2: memref<1x128x6xf32, #tpu.memory_space<vmem>>, %arg3: memref<1x8x8x6xf32, #tpu.memory_space<vmem>>, %arg4: memref<1x8x3xf32, #tpu.memory_space<vmem>>) attributes {dimension_semantics = [#tpu.dimension_semantics<parallel>], iteration_bounds = array<i64: 2>, scalar_prefetch = 0 : i64, scratch_operands = 0 : i64, tpu.core_type = #tpu.core_type<tc>, window_params = [{transform_indices = @transform_0, window_bounds = array<i64: 1, 3, 128>}, {transform_indices = @transform_1, window_bounds = array<i64: 1, 128, 6>}, {transform_indices = @transform_2, window_bounds = array<i64: 1, 8, 8, 6>}, {transform_indices = @transform_3, window_bounds = array<i64: 1, 8, 3>}]} {
    %c0 = arith.constant 0 : index
    %c0_0 = arith.constant 0 : index
    %c0_1 = arith.constant 0 : index
    %0 = vector.load %arg1[%c0, %c0_0, %c0_1] : memref<1x3x128xf32, #tpu.memory_space<vmem>>, vector<1x3x128xf32>
    %1 = vector.shape_cast %0 : vector<1x3x128xf32> to vector<3x128xf32>
    %c0_2 = arith.constant 0 : index
    %c0_3 = arith.constant 0 : index
    %c0_4 = arith.constant 0 : index
    %2 = vector.load %arg2[%c0_2, %c0_3, %c0_4] : memref<1x128x6xf32, #tpu.memory_space<vmem>>, vector<1x128x6xf32>
    %3 = vector.shape_cast %2 : vector<1x128x6xf32> to vector<128x6xf32>
    %4 = vector.extract_strided_slice %1 {offsets = [0, 0], sizes = [1, 128], strides = [1, 1]} : vector<3x128xf32> to vector<1x128xf32>
    %5 = vector.extract_strided_slice %1 {offsets = [1, 0], sizes = [1, 128], strides = [1, 1]} : vector<3x128xf32> to vector<1x128xf32>
    %6 = vector.extract_strided_slice %1 {offsets = [2, 0], sizes = [1, 128], strides = [1, 1]} : vector<3x128xf32> to vector<1x128xf32>
    %7 = tpu.iota {dimensions = array<i32: 1>} : vector<1x128xi32>
    %8 = tpu.iota {dimensions = array<i32: 0>} : vector<8x1xi32>
    %9 = tpu.iota {dimensions = array<i32: 1>} : vector<8x128xi32>
    %c64_i32 = arith.constant 64 : i32
    %10 = vector.broadcast %c64_i32 : i32 to vector<1x128xi32>
    %11 = arith.cmpi slt, %7, %10 : vector<1x128xi32>
    %cst = arith.constant 1.000000e+10 : f32
    %cst_5 = arith.constant -1.000000e+00 : f32
    %12 = vector.broadcast %cst : f32 to vector<1x128xf32>
    %13 = vector.broadcast %cst_5 : f32 to vector<1x128xf32>
    %14 = arith.select %11, %12, %13 : vector<1x128xi1>, vector<1x128xf32>
    %c0_i32 = arith.constant 0 : i32
    %15 = vector.broadcast %c0_i32 : i32 to vector<1x1xi32>
    %cst_6 = arith.constant 0.000000e+00 : f32
    %16 = vector.broadcast %cst_6 : f32 to vector<8x6xf32>
    %c0_i32_7 = arith.constant 0 : i32
    %c8_i32 = arith.constant 8 : i32
    %17 = arith.addi %c0_i32_7, %c8_i32 : i32
    %c1_i32 = arith.constant 1 : i32
    %18:3 = scf.for %arg5 = %c0_i32_7 to %17 step %c1_i32 iter_args(%arg6 = %14, %arg7 = %15, %arg8 = %16) -> (vector<1x128xf32>, vector<1x1xi32>, vector<8x6xf32>)  : i32 {
      %207 = vector.broadcast %arg7 : vector<1x1xi32> to vector<1x128xi32>
      %208 = arith.cmpi eq, %7, %207 : vector<1x128xi32>
      %209 = arith.extui %208 : vector<1x128xi1> to vector<1x128xi32>
      %210 = arith.sitofp %209 : vector<1x128xi32> to vector<1x128xf32>
      %cst_80 = arith.constant dense<0.000000e+00> : vector<1x6xf32>
      %211 = tpu.matmul %210, %3, %cst_80 {dimension_numbers = #tpu.dot_dimension_numbers<[1], [0], [0], [1], [0, 0, 1, 1], [], []>} : vector<1x128xf32>, vector<128x6xf32>, vector<1x6xf32> -> vector<1x6xf32>
      %212 = vector.broadcast %arg5 : i32 to vector<8x1xi32>
      %213 = arith.cmpi eq, %8, %212 : vector<8x1xi32>
      %214 = vector.shape_cast %213 : vector<8x1xi1> to vector<8x1xi1>
      %215 = vector.broadcast %214 : vector<8x1xi1> to vector<8x6xi1>
      %216 = vector.shape_cast %211 : vector<1x6xf32> to vector<1x6xf32>
      %217 = vector.broadcast %216 : vector<1x6xf32> to vector<8x6xf32>
      %218 = arith.select %215, %217, %arg8 : vector<8x6xi1>, vector<8x6xf32>
      %219 = vector.extract_strided_slice %211 {offsets = [0, 0], sizes = [1, 1], strides = [1, 1]} : vector<1x6xf32> to vector<1x1xf32>
      %220 = vector.broadcast %219 : vector<1x1xf32> to vector<1x128xf32>
      %221 = arith.subf %4, %220 : vector<1x128xf32>
      %222 = vector.extract_strided_slice %211 {offsets = [0, 1], sizes = [1, 1], strides = [1, 1]} : vector<1x6xf32> to vector<1x1xf32>
      %223 = vector.broadcast %222 : vector<1x1xf32> to vector<1x128xf32>
      %224 = arith.subf %5, %223 : vector<1x128xf32>
      %225 = vector.extract_strided_slice %211 {offsets = [0, 2], sizes = [1, 1], strides = [1, 1]} : vector<1x6xf32> to vector<1x1xf32>
      %226 = vector.broadcast %225 : vector<1x1xf32> to vector<1x128xf32>
      %227 = arith.subf %6, %226 : vector<1x128xf32>
      %228 = arith.mulf %221, %221 : vector<1x128xf32>
      %229 = arith.mulf %224, %224 : vector<1x128xf32>
      %230 = arith.addf %228, %229 : vector<1x128xf32>
      %231 = arith.mulf %227, %227 : vector<1x128xf32>
      %232 = arith.addf %230, %231 : vector<1x128xf32>
      %233 = arith.minimumf %arg6, %232 : vector<1x128xf32>
      %cst_81 = arith.constant dense<0xFF800000> : vector<1xf32>
      %234 = vector.multi_reduction <maximumf>, %233, %cst_81 [1] : vector<1x128xf32> to vector<1xf32>
      %235 = vector.shape_cast %234 : vector<1xf32> to vector<1x1xf32>
      %236 = vector.broadcast %235 : vector<1x1xf32> to vector<1x128xf32>
      %237 = arith.cmpf oge, %233, %236 : vector<1x128xf32>
      %c128_i32_82 = arith.constant 128 : i32
      %238 = vector.broadcast %c128_i32_82 : i32 to vector<1x128xi32>
      %239 = arith.select %237, %7, %238 : vector<1x128xi1>, vector<1x128xi32>
      %cst_83 = arith.constant dense<2147483647> : vector<1xi32>
      %240 = vector.multi_reduction <minsi>, %239, %cst_83 [1] : vector<1x128xi32> to vector<1xi32>
      %241 = vector.shape_cast %240 : vector<1xi32> to vector<1x1xi32>
      scf.yield %233, %241, %218 : vector<1x128xf32>, vector<1x1xi32>, vector<8x6xf32>
    }
    %c8_i32_8 = arith.constant 8 : i32
    %19 = vector.extract_strided_slice %18#2 {offsets = [0, 0], sizes = [8, 3], strides = [1, 1]} : vector<8x6xf32> to vector<8x3xf32>
    %c0_9 = arith.constant 0 : index
    %c0_10 = arith.constant 0 : index
    %c0_11 = arith.constant 0 : index
    %20 = vector.load %arg4[%c0_9, %c0_10, %c0_11] : memref<1x8x3xf32, #tpu.memory_space<vmem>>, vector<1x8x3xf32>
    %21 = vector.shape_cast %20 : vector<1x8x3xf32> to vector<8x3xf32>
    %22 = vector.shape_cast %19 : vector<8x3xf32> to vector<1x8x3xf32>
    tpu.vector_store %arg4[%c0_9, %c0_10, %c0_11], %22 {strides = array<i32>} : memref<1x8x3xf32, #tpu.memory_space<vmem>>, vector<1x8x3xf32>,
    %cst_12 = arith.constant 0.000000e+00 : f32
    %23 = vector.broadcast %cst_12 : f32 to vector<8x3xf32>
    %24 = tpu.concatenate %19, %23 in 1 : vector<8x3xf32>, vector<8x3xf32> -> vector<8x6xf32>
    %cst_13 = arith.constant 0.000000e+00 : f32
    %25 = vector.broadcast %cst_13 : f32 to vector<8x128xf32>
    %26 = vector.extract_strided_slice %19 {offsets = [0, 0], sizes = [8, 1], strides = [1, 1]} : vector<8x3xf32> to vector<8x1xf32>
    %27 = vector.extract_strided_slice %1 {offsets = [0, 0], sizes = [1, 128], strides = [1, 1]} : vector<3x128xf32> to vector<1x128xf32>
    %28 = vector.broadcast %26 : vector<8x1xf32> to vector<8x128xf32>
    %29 = vector.broadcast %27 : vector<1x128xf32> to vector<8x128xf32>
    %30 = arith.subf %28, %29 : vector<8x128xf32>
    %31 = arith.mulf %30, %30 : vector<8x128xf32>
    %32 = arith.addf %25, %31 : vector<8x128xf32>
    %33 = vector.extract_strided_slice %19 {offsets = [0, 1], sizes = [8, 1], strides = [1, 1]} : vector<8x3xf32> to vector<8x1xf32>
    %34 = vector.extract_strided_slice %1 {offsets = [1, 0], sizes = [1, 128], strides = [1, 1]} : vector<3x128xf32> to vector<1x128xf32>
    %35 = vector.broadcast %33 : vector<8x1xf32> to vector<8x128xf32>
    %36 = vector.broadcast %34 : vector<1x128xf32> to vector<8x128xf32>
    %37 = arith.subf %35, %36 : vector<8x128xf32>
    %38 = arith.mulf %37, %37 : vector<8x128xf32>
    %39 = arith.addf %32, %38 : vector<8x128xf32>
    %40 = vector.extract_strided_slice %19 {offsets = [0, 2], sizes = [8, 1], strides = [1, 1]} : vector<8x3xf32> to vector<8x1xf32>
    %41 = vector.extract_strided_slice %1 {offsets = [2, 0], sizes = [1, 128], strides = [1, 1]} : vector<3x128xf32> to vector<1x128xf32>
    %42 = vector.broadcast %40 : vector<8x1xf32> to vector<8x128xf32>
    %43 = vector.broadcast %41 : vector<1x128xf32> to vector<8x128xf32>
    %44 = arith.subf %42, %43 : vector<8x128xf32>
    %45 = arith.mulf %44, %44 : vector<8x128xf32>
    %46 = arith.addf %39, %45 : vector<8x128xf32>
    %c0_i32_14 = arith.constant 0 : i32
    %cst_15 = arith.constant dense<0x7F800000> : vector<8xf32>
    %47 = vector.multi_reduction <minimumf>, %46, %cst_15 [1] : vector<8x128xf32> to vector<8xf32>
    %48 = vector.shape_cast %47 : vector<8xf32> to vector<8x1xf32>
    %49 = vector.broadcast %48 : vector<8x1xf32> to vector<8x128xf32>
    %50 = arith.cmpf ole, %46, %49 : vector<8x128xf32>
    %c128_i32 = arith.constant 128 : i32
    %51 = vector.broadcast %c128_i32 : i32 to vector<8x128xi32>
    %52 = arith.select %50, %9, %51 : vector<8x128xi1>, vector<8x128xi32>
    %cst_16 = arith.constant dense<2147483647> : vector<8xi32>
    %53 = vector.multi_reduction <minsi>, %52, %cst_16 [1] : vector<8x128xi32> to vector<8xi32>
    %54 = vector.shape_cast %53 : vector<8xi32> to vector<8x1xi32>
    %55 = vector.broadcast %54 : vector<8x1xi32> to vector<8x128xi32>
    %56 = arith.cmpi eq, %9, %55 : vector<8x128xi32>
    %57 = arith.extui %56 : vector<8x128xi1> to vector<8x128xi32>
    %58 = arith.sitofp %57 : vector<8x128xi32> to vector<8x128xf32>
    %cst_17 = arith.constant dense<0.000000e+00> : vector<8x6xf32>
    %59 = tpu.matmul %58, %3, %cst_17 {dimension_numbers = #tpu.dot_dimension_numbers<[1], [0], [0], [1], [0, 0, 1, 1], [], []>} : vector<8x128xf32>, vector<128x6xf32>, vector<8x6xf32> -> vector<8x6xf32>
    %60 = arith.subf %59, %24 : vector<8x6xf32>
    %c0_18 = arith.constant 0 : index
    %61 = arith.index_cast %c0_i32_14 : i32 to index
    %c0_19 = arith.constant 0 : index
    %c0_20 = arith.constant 0 : index
    %62 = vector.load %arg3[%c0_18, %61, %c0_19, %c0_20] : memref<1x8x8x6xf32, #tpu.memory_space<vmem>>, vector<1x1x8x6xf32>
    %63 = vector.shape_cast %62 : vector<1x1x8x6xf32> to vector<8x6xf32>
    %64 = vector.shape_cast %60 : vector<8x6xf32> to vector<1x1x8x6xf32>
    tpu.vector_store %arg3[%c0_18, %61, %c0_19, %c0_20], %64 {strides = array<i32>} : memref<1x8x8x6xf32, #tpu.memory_space<vmem>>, vector<1x1x8x6xf32>,
    %cst_21 = arith.constant 1.000000e+30 : f32
    %65 = vector.broadcast %cst_21 : f32 to vector<8x128xf32>
    %66 = arith.select %56, %65, %46 : vector<8x128xi1>, vector<8x128xf32>
    %c1_i32_22 = arith.constant 1 : i32
    %cst_23 = arith.constant dense<0x7F800000> : vector<8xf32>
    %67 = vector.multi_reduction <minimumf>, %66, %cst_23 [1] : vector<8x128xf32> to vector<8xf32>
    %68 = vector.shape_cast %67 : vector<8xf32> to vector<8x1xf32>
    %69 = vector.broadcast %68 : vector<8x1xf32> to vector<8x128xf32>
    %70 = arith.cmpf ole, %66, %69 : vector<8x128xf32>
    %c128_i32_24 = arith.constant 128 : i32
    %71 = vector.broadcast %c128_i32_24 : i32 to vector<8x128xi32>
    %72 = arith.select %70, %9, %71 : vector<8x128xi1>, vector<8x128xi32>
    %cst_25 = arith.constant dense<2147483647> : vector<8xi32>
    %73 = vector.multi_reduction <minsi>, %72, %cst_25 [1] : vector<8x128xi32> to vector<8xi32>
    %74 = vector.shape_cast %73 : vector<8xi32> to vector<8x1xi32>
    %75 = vector.broadcast %74 : vector<8x1xi32> to vector<8x128xi32>
    %76 = arith.cmpi eq, %9, %75 : vector<8x128xi32>
    %77 = arith.extui %76 : vector<8x128xi1> to vector<8x128xi32>
    %78 = arith.sitofp %77 : vector<8x128xi32> to vector<8x128xf32>
    %cst_26 = arith.constant dense<0.000000e+00> : vector<8x6xf32>
    %79 = tpu.matmul %78, %3, %cst_26 {dimension_numbers = #tpu.dot_dimension_numbers<[1], [0], [0], [1], [0, 0, 1, 1], [], []>} : vector<8x128xf32>, vector<128x6xf32>, vector<8x6xf32> -> vector<8x6xf32>
    %80 = arith.subf %79, %24 : vector<8x6xf32>
    %c0_27 = arith.constant 0 : index
    %81 = arith.index_cast %c1_i32_22 : i32 to index
    %c0_28 = arith.constant 0 : index
    %c0_29 = arith.constant 0 : index
    %82 = vector.load %arg3[%c0_27, %81, %c0_28, %c0_29] : memref<1x8x8x6xf32, #tpu.memory_space<vmem>>, vector<1x1x8x6xf32>
    %83 = vector.shape_cast %82 : vector<1x1x8x6xf32> to vector<8x6xf32>
    %84 = vector.shape_cast %80 : vector<8x6xf32> to vector<1x1x8x6xf32>
    tpu.vector_store %arg3[%c0_27, %81, %c0_28, %c0_29], %84 {strides = array<i32>} : memref<1x8x8x6xf32, #tpu.memory_space<vmem>>, vector<1x1x8x6xf32>,
    %cst_30 = arith.constant 1.000000e+30 : f32
    %85 = vector.broadcast %cst_30 : f32 to vector<8x128xf32>
    %86 = arith.select %76, %85, %66 : vector<8x128xi1>, vector<8x128xf32>
    %c2_i32 = arith.constant 2 : i32
    %cst_31 = arith.constant dense<0x7F800000> : vector<8xf32>
    %87 = vector.multi_reduction <minimumf>, %86, %cst_31 [1] : vector<8x128xf32> to vector<8xf32>
    %88 = vector.shape_cast %87 : vector<8xf32> to vector<8x1xf32>
    %89 = vector.broadcast %88 : vector<8x1xf32> to vector<8x128xf32>
    %90 = arith.cmpf ole, %86, %89 : vector<8x128xf32>
    %c128_i32_32 = arith.constant 128 : i32
    %91 = vector.broadcast %c128_i32_32 : i32 to vector<8x128xi32>
    %92 = arith.select %90, %9, %91 : vector<8x128xi1>, vector<8x128xi32>
    %cst_33 = arith.constant dense<2147483647> : vector<8xi32>
    %93 = vector.multi_reduction <minsi>, %92, %cst_33 [1] : vector<8x128xi32> to vector<8xi32>
    %94 = vector.shape_cast %93 : vector<8xi32> to vector<8x1xi32>
    %95 = vector.broadcast %94 : vector<8x1xi32> to vector<8x128xi32>
    %96 = arith.cmpi eq, %9, %95 : vector<8x128xi32>
    %97 = arith.extui %96 : vector<8x128xi1> to vector<8x128xi32>
    %98 = arith.sitofp %97 : vector<8x128xi32> to vector<8x128xf32>
    %cst_34 = arith.constant dense<0.000000e+00> : vector<8x6xf32>
    %99 = tpu.matmul %98, %3, %cst_34 {dimension_numbers = #tpu.dot_dimension_numbers<[1], [0], [0], [1], [0, 0, 1, 1], [], []>} : vector<8x128xf32>, vector<128x6xf32>, vector<8x6xf32> -> vector<8x6xf32>
    %100 = arith.subf %99, %24 : vector<8x6xf32>
    %c0_35 = arith.constant 0 : index
    %101 = arith.index_cast %c2_i32 : i32 to index
    %c0_36 = arith.constant 0 : index
    %c0_37 = arith.constant 0 : index
    %102 = vector.load %arg3[%c0_35, %101, %c0_36, %c0_37] : memref<1x8x8x6xf32, #tpu.memory_space<vmem>>, vector<1x1x8x6xf32>
    %103 = vector.shape_cast %102 : vector<1x1x8x6xf32> to vector<8x6xf32>
    %104 = vector.shape_cast %100 : vector<8x6xf32> to vector<1x1x8x6xf32>
    tpu.vector_store %arg3[%c0_35, %101, %c0_36, %c0_37], %104 {strides = array<i32>} : memref<1x8x8x6xf32, #tpu.memory_space<vmem>>, vector<1x1x8x6xf32>,
    %cst_38 = arith.constant 1.000000e+30 : f32
    %105 = vector.broadcast %cst_38 : f32 to vector<8x128xf32>
    %106 = arith.select %96, %105, %86 : vector<8x128xi1>, vector<8x128xf32>
    %c3_i32 = arith.constant 3 : i32
    %cst_39 = arith.constant dense<0x7F800000> : vector<8xf32>
    %107 = vector.multi_reduction <minimumf>, %106, %cst_39 [1] : vector<8x128xf32> to vector<8xf32>
    %108 = vector.shape_cast %107 : vector<8xf32> to vector<8x1xf32>
    %109 = vector.broadcast %108 : vector<8x1xf32> to vector<8x128xf32>
    %110 = arith.cmpf ole, %106, %109 : vector<8x128xf32>
    %c128_i32_40 = arith.constant 128 : i32
    %111 = vector.broadcast %c128_i32_40 : i32 to vector<8x128xi32>
    %112 = arith.select %110, %9, %111 : vector<8x128xi1>, vector<8x128xi32>
    %cst_41 = arith.constant dense<2147483647> : vector<8xi32>
    %113 = vector.multi_reduction <minsi>, %112, %cst_41 [1] : vector<8x128xi32> to vector<8xi32>
    %114 = vector.shape_cast %113 : vector<8xi32> to vector<8x1xi32>
    %115 = vector.broadcast %114 : vector<8x1xi32> to vector<8x128xi32>
    %116 = arith.cmpi eq, %9, %115 : vector<8x128xi32>
    %117 = arith.extui %116 : vector<8x128xi1> to vector<8x128xi32>
    %118 = arith.sitofp %117 : vector<8x128xi32> to vector<8x128xf32>
    %cst_42 = arith.constant dense<0.000000e+00> : vector<8x6xf32>
    %119 = tpu.matmul %118, %3, %cst_42 {dimension_numbers = #tpu.dot_dimension_numbers<[1], [0], [0], [1], [0, 0, 1, 1], [], []>} : vector<8x128xf32>, vector<128x6xf32>, vector<8x6xf32> -> vector<8x6xf32>
    %120 = arith.subf %119, %24 : vector<8x6xf32>
    %c0_43 = arith.constant 0 : index
    %121 = arith.index_cast %c3_i32 : i32 to index
    %c0_44 = arith.constant 0 : index
    %c0_45 = arith.constant 0 : index
    %122 = vector.load %arg3[%c0_43, %121, %c0_44, %c0_45] : memref<1x8x8x6xf32, #tpu.memory_space<vmem>>, vector<1x1x8x6xf32>
    %123 = vector.shape_cast %122 : vector<1x1x8x6xf32> to vector<8x6xf32>
    %124 = vector.shape_cast %120 : vector<8x6xf32> to vector<1x1x8x6xf32>
    tpu.vector_store %arg3[%c0_43, %121, %c0_44, %c0_45], %124 {strides = array<i32>} : memref<1x8x8x6xf32, #tpu.memory_space<vmem>>, vector<1x1x8x6xf32>,
    %cst_46 = arith.constant 1.000000e+30 : f32
    %125 = vector.broadcast %cst_46 : f32 to vector<8x128xf32>
    %126 = arith.select %116, %125, %106 : vector<8x128xi1>, vector<8x128xf32>
    %c4_i32 = arith.constant 4 : i32
    %cst_47 = arith.constant dense<0x7F800000> : vector<8xf32>
    %127 = vector.multi_reduction <minimumf>, %126, %cst_47 [1] : vector<8x128xf32> to vector<8xf32>
    %128 = vector.shape_cast %127 : vector<8xf32> to vector<8x1xf32>
    %129 = vector.broadcast %128 : vector<8x1xf32> to vector<8x128xf32>
    %130 = arith.cmpf ole, %126, %129 : vector<8x128xf32>
    %c128_i32_48 = arith.constant 128 : i32
    %131 = vector.broadcast %c128_i32_48 : i32 to vector<8x128xi32>
    %132 = arith.select %130, %9, %131 : vector<8x128xi1>, vector<8x128xi32>
    %cst_49 = arith.constant dense<2147483647> : vector<8xi32>
    %133 = vector.multi_reduction <minsi>, %132, %cst_49 [1] : vector<8x128xi32> to vector<8xi32>
    %134 = vector.shape_cast %133 : vector<8xi32> to vector<8x1xi32>
    %135 = vector.broadcast %134 : vector<8x1xi32> to vector<8x128xi32>
    %136 = arith.cmpi eq, %9, %135 : vector<8x128xi32>
    %137 = arith.extui %136 : vector<8x128xi1> to vector<8x128xi32>
    %138 = arith.sitofp %137 : vector<8x128xi32> to vector<8x128xf32>
    %cst_50 = arith.constant dense<0.000000e+00> : vector<8x6xf32>
    %139 = tpu.matmul %138, %3, %cst_50 {dimension_numbers = #tpu.dot_dimension_numbers<[1], [0], [0], [1], [0, 0, 1, 1], [], []>} : vector<8x128xf32>, vector<128x6xf32>, vector<8x6xf32> -> vector<8x6xf32>
    %140 = arith.subf %139, %24 : vector<8x6xf32>
    %c0_51 = arith.constant 0 : index
    %141 = arith.index_cast %c4_i32 : i32 to index
    %c0_52 = arith.constant 0 : index
    %c0_53 = arith.constant 0 : index
    %142 = vector.load %arg3[%c0_51, %141, %c0_52, %c0_53] : memref<1x8x8x6xf32, #tpu.memory_space<vmem>>, vector<1x1x8x6xf32>
    %143 = vector.shape_cast %142 : vector<1x1x8x6xf32> to vector<8x6xf32>
    %144 = vector.shape_cast %140 : vector<8x6xf32> to vector<1x1x8x6xf32>
    tpu.vector_store %arg3[%c0_51, %141, %c0_52, %c0_53], %144 {strides = array<i32>} : memref<1x8x8x6xf32, #tpu.memory_space<vmem>>, vector<1x1x8x6xf32>,
    %cst_54 = arith.constant 1.000000e+30 : f32
    %145 = vector.broadcast %cst_54 : f32 to vector<8x128xf32>
    %146 = arith.select %136, %145, %126 : vector<8x128xi1>, vector<8x128xf32>
    %c5_i32 = arith.constant 5 : i32
    %cst_55 = arith.constant dense<0x7F800000> : vector<8xf32>
    %147 = vector.multi_reduction <minimumf>, %146, %cst_55 [1] : vector<8x128xf32> to vector<8xf32>
    %148 = vector.shape_cast %147 : vector<8xf32> to vector<8x1xf32>
    %149 = vector.broadcast %148 : vector<8x1xf32> to vector<8x128xf32>
    %150 = arith.cmpf ole, %146, %149 : vector<8x128xf32>
    %c128_i32_56 = arith.constant 128 : i32
    %151 = vector.broadcast %c128_i32_56 : i32 to vector<8x128xi32>
    %152 = arith.select %150, %9, %151 : vector<8x128xi1>, vector<8x128xi32>
    %cst_57 = arith.constant dense<2147483647> : vector<8xi32>
    %153 = vector.multi_reduction <minsi>, %152, %cst_57 [1] : vector<8x128xi32> to vector<8xi32>
    %154 = vector.shape_cast %153 : vector<8xi32> to vector<8x1xi32>
    %155 = vector.broadcast %154 : vector<8x1xi32> to vector<8x128xi32>
    %156 = arith.cmpi eq, %9, %155 : vector<8x128xi32>
    %157 = arith.extui %156 : vector<8x128xi1> to vector<8x128xi32>
    %158 = arith.sitofp %157 : vector<8x128xi32> to vector<8x128xf32>
    %cst_58 = arith.constant dense<0.000000e+00> : vector<8x6xf32>
    %159 = tpu.matmul %158, %3, %cst_58 {dimension_numbers = #tpu.dot_dimension_numbers<[1], [0], [0], [1], [0, 0, 1, 1], [], []>} : vector<8x128xf32>, vector<128x6xf32>, vector<8x6xf32> -> vector<8x6xf32>
    %160 = arith.subf %159, %24 : vector<8x6xf32>
    %c0_59 = arith.constant 0 : index
    %161 = arith.index_cast %c5_i32 : i32 to index
    %c0_60 = arith.constant 0 : index
    %c0_61 = arith.constant 0 : index
    %162 = vector.load %arg3[%c0_59, %161, %c0_60, %c0_61] : memref<1x8x8x6xf32, #tpu.memory_space<vmem>>, vector<1x1x8x6xf32>
    %163 = vector.shape_cast %162 : vector<1x1x8x6xf32> to vector<8x6xf32>
    %164 = vector.shape_cast %160 : vector<8x6xf32> to vector<1x1x8x6xf32>
    tpu.vector_store %arg3[%c0_59, %161, %c0_60, %c0_61], %164 {strides = array<i32>} : memref<1x8x8x6xf32, #tpu.memory_space<vmem>>, vector<1x1x8x6xf32>,
    %cst_62 = arith.constant 1.000000e+30 : f32
    %165 = vector.broadcast %cst_62 : f32 to vector<8x128xf32>
    %166 = arith.select %156, %165, %146 : vector<8x128xi1>, vector<8x128xf32>
    %c6_i32 = arith.constant 6 : i32
    %cst_63 = arith.constant dense<0x7F800000> : vector<8xf32>
    %167 = vector.multi_reduction <minimumf>, %166, %cst_63 [1] : vector<8x128xf32> to vector<8xf32>
    %168 = vector.shape_cast %167 : vector<8xf32> to vector<8x1xf32>
    %169 = vector.broadcast %168 : vector<8x1xf32> to vector<8x128xf32>
    %170 = arith.cmpf ole, %166, %169 : vector<8x128xf32>
    %c128_i32_64 = arith.constant 128 : i32
    %171 = vector.broadcast %c128_i32_64 : i32 to vector<8x128xi32>
    %172 = arith.select %170, %9, %171 : vector<8x128xi1>, vector<8x128xi32>
    %cst_65 = arith.constant dense<2147483647> : vector<8xi32>
    %173 = vector.multi_reduction <minsi>, %172, %cst_65 [1] : vector<8x128xi32> to vector<8xi32>
    %174 = vector.shape_cast %173 : vector<8xi32> to vector<8x1xi32>
    %175 = vector.broadcast %174 : vector<8x1xi32> to vector<8x128xi32>
    %176 = arith.cmpi eq, %9, %175 : vector<8x128xi32>
    %177 = arith.extui %176 : vector<8x128xi1> to vector<8x128xi32>
    %178 = arith.sitofp %177 : vector<8x128xi32> to vector<8x128xf32>
    %cst_66 = arith.constant dense<0.000000e+00> : vector<8x6xf32>
    %179 = tpu.matmul %178, %3, %cst_66 {dimension_numbers = #tpu.dot_dimension_numbers<[1], [0], [0], [1], [0, 0, 1, 1], [], []>} : vector<8x128xf32>, vector<128x6xf32>, vector<8x6xf32> -> vector<8x6xf32>
    %180 = arith.subf %179, %24 : vector<8x6xf32>
    %c0_67 = arith.constant 0 : index
    %181 = arith.index_cast %c6_i32 : i32 to index
    %c0_68 = arith.constant 0 : index
    %c0_69 = arith.constant 0 : index
    %182 = vector.load %arg3[%c0_67, %181, %c0_68, %c0_69] : memref<1x8x8x6xf32, #tpu.memory_space<vmem>>, vector<1x1x8x6xf32>
    %183 = vector.shape_cast %182 : vector<1x1x8x6xf32> to vector<8x6xf32>
    %184 = vector.shape_cast %180 : vector<8x6xf32> to vector<1x1x8x6xf32>
    tpu.vector_store %arg3[%c0_67, %181, %c0_68, %c0_69], %184 {strides = array<i32>} : memref<1x8x8x6xf32, #tpu.memory_space<vmem>>, vector<1x1x8x6xf32>,
    %cst_70 = arith.constant 1.000000e+30 : f32
    %185 = vector.broadcast %cst_70 : f32 to vector<8x128xf32>
    %186 = arith.select %176, %185, %166 : vector<8x128xi1>, vector<8x128xf32>
    %c7_i32 = arith.constant 7 : i32
    %cst_71 = arith.constant dense<0x7F800000> : vector<8xf32>
    %187 = vector.multi_reduction <minimumf>, %186, %cst_71 [1] : vector<8x128xf32> to vector<8xf32>
    %188 = vector.shape_cast %187 : vector<8xf32> to vector<8x1xf32>
    %189 = vector.broadcast %188 : vector<8x1xf32> to vector<8x128xf32>
    %190 = arith.cmpf ole, %186, %189 : vector<8x128xf32>
    %c128_i32_72 = arith.constant 128 : i32
    %191 = vector.broadcast %c128_i32_72 : i32 to vector<8x128xi32>
    %192 = arith.select %190, %9, %191 : vector<8x128xi1>, vector<8x128xi32>
    %cst_73 = arith.constant dense<2147483647> : vector<8xi32>
    %193 = vector.multi_reduction <minsi>, %192, %cst_73 [1] : vector<8x128xi32> to vector<8xi32>
    %194 = vector.shape_cast %193 : vector<8xi32> to vector<8x1xi32>
    %195 = vector.broadcast %194 : vector<8x1xi32> to vector<8x128xi32>
    %196 = arith.cmpi eq, %9, %195 : vector<8x128xi32>
    %197 = arith.extui %196 : vector<8x128xi1> to vector<8x128xi32>
    %198 = arith.sitofp %197 : vector<8x128xi32> to vector<8x128xf32>
    %cst_74 = arith.constant dense<0.000000e+00> : vector<8x6xf32>
    %199 = tpu.matmul %198, %3, %cst_74 {dimension_numbers = #tpu.dot_dimension_numbers<[1], [0], [0], [1], [0, 0, 1, 1], [], []>} : vector<8x128xf32>, vector<128x6xf32>, vector<8x6xf32> -> vector<8x6xf32>
    %200 = arith.subf %199, %24 : vector<8x6xf32>
    %c0_75 = arith.constant 0 : index
    %201 = arith.index_cast %c7_i32 : i32 to index
    %c0_76 = arith.constant 0 : index
    %c0_77 = arith.constant 0 : index
    %202 = vector.load %arg3[%c0_75, %201, %c0_76, %c0_77] : memref<1x8x8x6xf32, #tpu.memory_space<vmem>>, vector<1x1x8x6xf32>
    %203 = vector.shape_cast %202 : vector<1x1x8x6xf32> to vector<8x6xf32>
    %204 = vector.shape_cast %200 : vector<8x6xf32> to vector<1x1x8x6xf32>
    tpu.vector_store %arg3[%c0_75, %201, %c0_76, %c0_77], %204 {strides = array<i32>} : memref<1x8x8x6xf32, #tpu.memory_space<vmem>>, vector<1x1x8x6xf32>,
    %cst_78 = arith.constant 1.000000e+30 : f32
    %205 = vector.broadcast %cst_78 : f32 to vector<8x128xf32>
    %206 = arith.select %196, %205, %186 : vector<8x128xi1>, vector<8x128xf32>
    %c8_i32_79 = arith.constant 8 : i32
    return
  }
  func.func @transform_0(%arg0: i32) -> (i32, i32, i32) {
    %c0_i32 = arith.constant 0 : i32
    %c0_i32_0 = arith.constant 0 : i32
    %c0_i32_1 = arith.constant 0 : i32
    return %arg0, %c0_i32, %c0_i32_0 : i32, i32, i32
  }
  func.func @transform_1(%arg0: i32) -> (i32, i32, i32) {
    %c0_i32 = arith.constant 0 : i32
    %c0_i32_0 = arith.constant 0 : i32
    %c0_i32_1 = arith.constant 0 : i32
    return %arg0, %c0_i32, %c0_i32_0 : i32, i32, i32
  }
  func.func @transform_2(%arg0: i32) -> (i32, i32, i32, i32) {
    %c0_i32 = arith.constant 0 : i32
    %c0_i32_0 = arith.constant 0 : i32
    %c0_i32_1 = arith.constant 0 : i32
    %c0_i32_2 = arith.constant 0 : i32
    return %arg0, %c0_i32, %c0_i32_0, %c0_i32_1 : i32, i32, i32, i32
  }
  func.func @transform_3(%arg0: i32) -> (i32, i32, i32) {
    %c0_i32 = arith.constant 0 : i32
    %c0_i32_0 = arith.constant 0 : i32
    %c0_i32_1 = arith.constant 0 : i32
    return %arg0, %c0_i32, %c0_i32_0 : i32, i32, i32
  }
}

</mosaic_0001>

<llo_original>
// kernel: tpu_custom_call.1
$region0: #{tpu_custom_call.1}
  #allocation0 [shape = 'u32[]', space=smem, size = 0x4, offset = 0x4, fixed_abs, tag = 'smem constant byte address 0x4 - core index']
  #allocation1 [shape = 'u32[144,128]{1,0:T(1,128)}', space=vmem, size = 0x12000, scoped, tag = 'internal scratch']
  %s0 = inlined_call_operand.vmem [shape: f32[2,3,128], index: 0, kind: input, shape index: {}]
  %s1 = inlined_call_operand.vmem [shape: f32[2,128,6], index: 1, kind: input, shape index: {}]
  %s2 = inlined_call_operand.vmem [shape: f32[2,8,8,6], index: 2, kind: output, shape index: {0}]
  %s3 = inlined_call_operand.vmem [shape: f32[2,8,3], index: 3, kind: output, shape index: {1}]
  %4 = xla_tuple %s2, %s3
  %s5 = sld [smem:[#allocation0]]
  $region56: #{tpu_custom_call.1} parent=0
    _
  %s7 = ssub.s32 1, %s5
  %s8 = scalar_select 0, %s7, %s5
  loop: start=0, step=1, limit=4
  $region2: #{tpu_custom_call.1} parent=0 // loop_pre_header
    _
  $region3: #{tpu_custom_call.1} parent=0 // loop_header
    %s10 = sphi 0, %s14
    %p11 = scmp.ge.s32.totalorder %s10, 4
    %s20 = sphi 0, %s22
    %s23 = sphi 0, %s20
    %s24 = sphi 0, %s23
    %s40 = sphi 0, %s24
    %s46 = sphi 0, %s48
    %s49 = sphi 0, %s46
    %s50 = sphi 0, %s49
    %s66 = sphi 0, %s50
    %s72 = sphi 0, %s74
    %s75 = sphi 0, %s72
    %s76 = sphi 0, %s75
    %s92 = sphi 0, %s76
    %s98 = sphi 0, %s100
    %s101 = sphi 0, %s98
    %s102 = sphi 0, %s101
    %s118 = sphi 0, %s102
  $region4: #{tpu_custom_call.1} parent=0 // loop_header_branch
    %13 = sbr.rel (%p11) target = $region8
  $region5: #{tpu_custom_call.1} parent=0 // loop_body
    %s15 = ssub.s32 %s10, 1
    %s16 = ssub.s32 %s10, 2
    %s17 = sadd.s32 %s10, 1
    %s18 = ssub.s32 %s10, %s17
    %p19 = scmp.eq.s32.totalorder %s18, 0
    %s21 = sadd.s32 %s20, 1
    %s22 = scalar_select %p19, %s20, %s21
    %p25 = pneg %p19
    %p26 = scmp.eq.s32.totalorder %s10, 1
    %p27 = por %p25, %p26
    %p28 = scmp.ne.s32.totalorder %s20, %s23
    %p29 = scmp.eq.s32.totalorder %s10, 0
    %p30 = por %p28, %p29
    %p31 = scmp.ne.s32.totalorder %s20, %s23
    %p32 = scmp.eq.s32.totalorder %s15, 1
    %p33 = por %p31, %p32
    %p34 = scmp.ne.s32.totalorder %s23, %s24
    %p35 = scmp.eq.s32.totalorder %s15, 0
    %p36 = por %p34, %p35
    %p37 = scmp.ne.s32.totalorder %s23, %s24
    %p38 = scmp.eq.s32.totalorder %s16, 1
    %p39 = por %p37, %p38
    %p41 = scmp.ne.s32.totalorder %s24, %s40
    %p42 = scmp.eq.s32.totalorder %s16, 0
    %p43 = por %p41, %p42
    %s44 = ssub.s32 %s10, %s17
    %p45 = scmp.eq.s32.totalorder %s44, 0
    %s47 = sadd.s32 %s46, 1
    %s48 = scalar_select %p45, %s46, %s47
    %p51 = pneg %p45
    %p52 = scmp.eq.s32.totalorder %s10, 1
    %p53 = por %p51, %p52
    %p54 = scmp.ne.s32.totalorder %s46, %s49
    %p55 = scmp.eq.s32.totalorder %s10, 0
    %p56 = por %p54, %p55
    %p57 = scmp.ne.s32.totalorder %s46, %s49
    %p58 = scmp.eq.s32.totalorder %s15, 1
    %p59 = por %p57, %p58
    %p60 = scmp.ne.s32.totalorder %s49, %s50
    %p61 = scmp.eq.s32.totalorder %s15, 0
    %p62 = por %p60, %p61
    %p63 = scmp.ne.s32.totalorder %s49, %s50
    %p64 = scmp.eq.s32.totalorder %s16, 1
    %p65 = por %p63, %p64
    %p67 = scmp.ne.s32.totalorder %s50, %s66
    %p68 = scmp.eq.s32.totalorder %s16, 0
    %p69 = por %p67, %p68
    %s70 = ssub.s32 %s10, %s17
    %p71 = scmp.eq.s32.totalorder %s70, 0
    %s73 = sadd.s32 %s72, 1
    %s74 = scalar_select %p71, %s72, %s73
    %p77 = pneg %p71
    %p78 = scmp.eq.s32.totalorder %s10, 1
    %p79 = por %p77, %p78
    %p80 = scmp.ne.s32.totalorder %s72, %s75
    %p81 = scmp.eq.s32.totalorder %s10, 0
    %p82 = por %p80, %p81
    %p83 = scmp.ne.s32.totalorder %s72, %s75
    %p84 = scmp.eq.s32.totalorder %s15, 1
    %p85 = por %p83, %p84
    %p86 = scmp.ne.s32.totalorder %s75, %s76
    %p87 = scmp.eq.s32.totalorder %s15, 0
    %p88 = por %p86, %p87
    %p89 = scmp.ne.s32.totalorder %s75, %s76
    %p90 = scmp.eq.s32.totalorder %s16, 1
    %p91 = por %p89, %p90
    %p93 = scmp.ne.s32.totalorder %s76, %s92
    %p94 = scmp.eq.s32.totalorder %s16, 0
    %p95 = por %p93, %p94
    %s96 = ssub.s32 %s10, %s17
    %p97 = scmp.eq.s32.totalorder %s96, 0
    %s99 = sadd.s32 %s98, 1
    %s100 = scalar_select %p97, %s98, %s99
    %p103 = pneg %p97
    %p104 = scmp.eq.s32.totalorder %s10, 1
    %p105 = por %p103, %p104
    %p106 = scmp.ne.s32.totalorder %s98, %s101
    %p107 = scmp.eq.s32.totalorder %s10, 0
    %p108 = por %p106, %p107
    %p109 = scmp.ne.s32.totalorder %s98, %s101
    %p110 = scmp.eq.s32.totalorder %s15, 1
    %p111 = por %p109, %p110
    %p112 = scmp.ne.s32.totalorder %s101, %s102
    %p113 = scmp.eq.s32.totalorder %s15, 0
    %p114 = por %p112, %p113
    %p115 = scmp.ne.s32.totalorder %s101, %s102
    %p116 = scmp.eq.s32.totalorder %s16, 1
    %p117 = por %p115, %p116
    %p119 = scmp.ne.s32.totalorder %s102, %s118
    %p120 = scmp.eq.s32.totalorder %s16, 0
    %p121 = por %p119, %p120
    %p122 = scmp.le.s32.totalorder 1, %s10
    %p123 = scmp.lt.s32.totalorder %s10, 3
    %p124 = pnand %p122, %p123
    %p125 = pneg %p124
    // Predicated region
    $region9: #{tpu_custom_call.1} parent=5 // pred_check
      _
    $region10: #{tpu_custom_call.1} parent=5 // pred_check_branch
      %127 = sbr.rel (%p124) target = $region12
    $region11: #{tpu_custom_call.1} parent=5 // pred_region
      %s128 = ssub.s32 %s10, 1
    $region12: #{tpu_custom_call.1} parent=5 // pred_fallthru
      _
    %p129 = scmp.lt.s32.totalorder %s10, 2
    // Predicated region
    $region13: #{tpu_custom_call.1} parent=5 // pred_check
      %p130 = pneg %p129
    $region14: #{tpu_custom_call.1} parent=5 // pred_check_branch
      %132 = sbr.rel (%p130) target = $region16
    $region15: #{tpu_custom_call.1} parent=5 // pred_region
      // Predicated region
      $region17: #{tpu_custom_call.1} parent=15 // pred_check
        %p133 = pneg %p30
      $region18: #{tpu_custom_call.1} parent=15 // pred_check_branch
        %135 = sbr.rel (%p133) target = $region20
      $region19: #{tpu_custom_call.1} parent=15 // pred_region
        %p136 = scmp.lt.s32.totalorder %s10, 1
        %s137 = scalar_select %p136, %s10, 1
        %s138 = smul.addr %s137, 4
        %s139 = scalar_lea.vmem %s0, %s138
      $region20: #{tpu_custom_call.1} parent=15 // pred_fallthru
        _
      // Predicated region
      $region21: #{tpu_custom_call.1} parent=15 // pred_check
        %p140 = pneg %p56
      $region22: #{tpu_custom_call.1} parent=15 // pred_check_branch
        %142 = sbr.rel (%p140) target = $region24
      $region23: #{tpu_custom_call.1} parent=15 // pred_region
        %p143 = scmp.lt.s32.totalorder %s10, 1
        %s144 = scalar_select %p143, %s10, 1
        %s145 = smul.addr %s144, 16
        %s146 = smul.addr %s145, 8
        %s147 = scalar_lea.vmem %s1, %s146
      $region24: #{tpu_custom_call.1} parent=15 // pred_fallthru
        _
    $region16: #{tpu_custom_call.1} parent=5 // pred_fallthru
      _
    %p148 = scmp.le.s32.totalorder 1, %s10
    %p149 = scmp.lt.s32.totalorder %s10, 3
    %p150 = pnand %p148, %p149
    %p151 = pneg %p150
    // Predicated region
    $region25: #{tpu_custom_call.1} parent=5 // pred_check
      _
    $region26: #{tpu_custom_call.1} parent=5 // pred_check_branch
      %153 = sbr.rel (%p150) target = $region28
    $region27: #{tpu_custom_call.1} parent=5 // pred_region
      %s154 = ssub.s32 %s10, 1
      %p155 = scmp.lt.s32.totalorder %s15, 1
      %s156 = scalar_select %p155, %s15, 1
      %s157 = smul.addr %s156, 4
      %s158 = scalar_lea.vmem %s0, %s157
      %p159 = pneg %p36
      %p160 = pneg %p33
      %p161 = scmp.lt.s32.totalorder %s15, 1
      %s162 = scalar_select %p161, %s15, 1
      %s163 = smul.addr %s162, 16
      %s164 = smul.addr %s163, 8
      %s165 = scalar_lea.vmem %s1, %s164
      %p166 = pneg %p62
      %p167 = pneg %p59
      %p168 = pneg %p88
      %p169 = pneg %p85
      %p170 = scmp.lt.s32.totalorder %s15, 1
      %s171 = scalar_select %p170, %s15, 1
      %s172 = smul.addr %s171, 8
      %s173 = smul.addr %s172, 8
      %s174 = scalar_lea.vmem %s2, %s173
      %p175 = pneg %p114
      %p176 = pneg %p111
      %p177 = scmp.lt.s32.totalorder %s15, 1
      %s178 = scalar_select %p177, %s15, 1
      %s179 = smul.addr %s178, 8
      %s180 = scalar_lea.vmem %s3, %s179
      %p181 = scmp.lt.s32.totalorder %s15, 1
      %s182 = scalar_select %p181, %s15, 1
      %s183 = smul.addr %s182, 4
      %s184 = scalar_lea.vmem %s0, %s183
      %p185 = scmp.lt.s32.totalorder %s15, 1
      %s186 = scalar_select %p185, %s15, 1
      %s187 = smul.addr %s186, 16
      %s188 = smul.addr %s187, 8
      %s189 = scalar_lea.vmem %s1, %s188
      %p190 = scmp.lt.s32.totalorder %s15, 1
      %s191 = scalar_select %p190, %s15, 1
      %s192 = smul.addr %s191, 8
      %s193 = smul.addr %s192, 8
      %s194 = scalar_lea.vmem %s2, %s193
      %p195 = scmp.lt.s32.totalorder %s15, 1
      %s196 = scalar_select %p195, %s15, 1
      %s197 = smul.addr %s196, 8
      %s198 = scalar_lea.vmem %s3, %s197
      %v199 = vld [vmem:[%s184] sm:$0x7]
      %v200 = vld [vmem:[%s189] sm:$0xff]
      %v201 = vld [vmem:[%s189 + $0x8] sm:$0xff]
      %v202 = vld [vmem:[%s189 + $0x10] sm:$0xff]
      %v203 = vld [vmem:[%s189 + $0x18] sm:$0xff]
      %v204 = vld [vmem:[%s189 + $0x20] sm:$0xff]
      %v205 = vld [vmem:[%s189 + $0x28] sm:$0xff]
      %v206 = vld [vmem:[%s189 + $0x30] sm:$0xff]
      %v207 = vld [vmem:[%s189 + $0x38] sm:$0xff]
      %v208 = vld [vmem:[%s189 + $0x40] sm:$0xff]
      %v209 = vld [vmem:[%s189 + $0x48] sm:$0xff]
      %v210 = vld [vmem:[%s189 + $0x50] sm:$0xff]
      %v211 = vld [vmem:[%s189 + $0x58] sm:$0xff]
      %v212 = vld [vmem:[%s189 + $0x60] sm:$0xff]
      %v213 = vld [vmem:[%s189 + $0x68] sm:$0xff]
      %v214 = vld [vmem:[%s189 + $0x70] sm:$0xff]
      %v215 = vld [vmem:[%s189 + $0x78] sm:$0xff]
      %v216 = vlaneseq
      %v217 = vand.u32 %v216, 127
      %v218 = vlaneseq
      %v219 = vshrl.u32 %v218, 7
      %vm220 = vcmp.lt.s32.totalorder %v217, 64
      %v221 = vsel %vm220, 1e+10, -1.0
      loop: start=0, step=1, limit=8
      $region29: #{tpu_custom_call.1} parent=27 // loop_pre_header
        _
      $region30: #{tpu_custom_call.1} parent=27 // loop_header
        %s223 = sphi 0, %s227
        %p224 = scmp.ge.s32.totalorder %s223, 8
        %v228 = vphi %v221, %v342
        %v229 = vphi 0, %v363
        %v230 = vphi 0.0, %v312
      $region31: #{tpu_custom_call.1} parent=27 // loop_header_branch
        %226 = sbr.rel (%p224) target = $region35
      $region32: #{tpu_custom_call.1} parent=27 // loop_body
        %vm231 = vcmp.eq.s32.totalorder %v217, %v229
        %v232 = vsel %vm231, 1, 0
        %v233 = vcvt.s32.f32 %v232
        %234 = vmatprep.subr.mxu0 0.0
        %235 = vmatpush1.msra.mxu0 %v200
        %236 = vmatprep.subr.mxu0 0.0
        %237 = vmatpush1.msra.mxu0 %v201
        %238 = vmatprep.subr.mxu0 0.0
        %239 = vmatpush1.msra.mxu0 %v202
        %240 = vmatprep.subr.mxu0 0.0
        %241 = vmatpush1.msra.mxu0 %v203
        %242 = vmatprep.subr.mxu0 0.0
        %243 = vmatpush1.msra.mxu0 %v204
        %244 = vmatprep.subr.mxu0 0.0
        %245 = vmatpush1.msra.mxu0 %v205
        %246 = vmatprep.subr.mxu0 0.0
        %247 = vmatpush1.msra.mxu0 %v206
        %248 = vmatprep.subr.mxu0 0.0
        %249 = vmatpush1.msra.mxu0 %v207
        %250 = vmatprep.subr.mxu0 0.0
        %251 = vmatpush1.msra.mxu0 %v208
        %252 = vmatprep.subr.mxu0 0.0
        %253 = vmatpush1.msra.mxu0 %v209
        %254 = vmatprep.subr.mxu0 0.0
        %255 = vmatpush1.msra.mxu0 %v210
        %256 = vmatprep.subr.mxu0 0.0
        %257 = vmatpush1.msra.mxu0 %v211
        %258 = vmatprep.subr.mxu0 0.0
        %259 = vmatpush1.msra.mxu0 %v212
        %260 = vmatprep.subr.mxu0 0.0
        %261 = vmatpush1.msra.mxu0 %v213
        %262 = vmatprep.subr.mxu0 0.0
        %263 = vmatpush1.msra.mxu0 %v214
        %264 = vmatprep.subr.mxu0 0.0
        %265 = vmatpush1.msra.mxu0 %v215
        %266 = vmatprep.subr.mxu0 0.0
        %267 = vmatpush1.msra.mxu0 0.0
        %268 = vmatprep.subr.mxu0 0.0
        %269 = vmatpush1.msra.mxu0 0.0
        %270 = vmatprep.subr.mxu0 0.0
        %271 = vmatpush1.msra.mxu0 0.0
        %272 = vmatprep.subr.mxu0 0.0
        %273 = vmatpush1.msra.mxu0 0.0
        %274 = vmatprep.subr.mxu0 0.0
        %275 = vmatpush1.msra.mxu0 0.0
        %276 = vmatprep.subr.mxu0 0.0
        %277 = vmatpush1.msra.mxu0 0.0
        %278 = vmatprep.subr.mxu0 0.0
        %279 = vmatpush1.msra.mxu0 0.0
        %280 = vmatprep.subr.mxu0 0.0
        %281 = vmatpush1.msra.mxu0 0.0
        %282 = vmatprep.subr.mxu0 0.0
        %283 = vmatpush1.msra.mxu0 0.0
        %284 = vmatprep.subr.mxu0 0.0
        %285 = vmatpush1.msra.mxu0 0.0
        %286 = vmatprep.subr.mxu0 0.0
        %287 = vmatpush1.msra.mxu0 0.0
        %288 = vmatprep.subr.mxu0 0.0
        %289 = vmatpush1.msra.mxu0 0.0
        %290 = vmatprep.subr.mxu0 0.0
        %291 = vmatpush1.msra.mxu0 0.0
        %292 = vmatprep.subr.mxu0 0.0
        %293 = vmatpush1.msra.mxu0 0.0
        %294 = vmatprep.subr.mxu0 0.0
        %295 = vmatpush1.msra.mxu0 0.0
        %296 = vmatprep.subr.mxu0 0.0
        %297 = vmatpush1.msra.mxu0 0.0
        %298 = vmatprep.mubr.f32.mxu0 0.0
        %299 = vmatmul.mubr.f32.gmra.mrb[0].mxu0 %v233
        %v300 = vpop.f32.mrb[0].mxu0
        %v301 = vadd.f32 0.0, %v300
        %v302 = vpop.f32.mrb[0].mxu0
        %303 = vdwg.mxu0
        %v304 = vstv %s223
        %vm305 = vcmp.eq.s32.totalorder %v219, %v304
        %v306 = vsel %vm305, 1, 0
        %vm307 = vcmp.eq.s32.totalorder %v306, 1
        %v308 = vlaneseq
        %v309 = vshrl.u32 %v308, 7
        %v310 = vsub.s32 0, %v309
        %v311 = vrot.slane %v301, %v310
        %v312 = vsel %vm307, %v311, %v230
        %314 = vset.pattern.permute.xlu0 0
        %315 = vperm.xlu0 %314, %v301
        %v316 = vpop.permute.xlu0 %315
        %v318 = vsub.f32 %v199, %v316
        %319 = vset.pattern.permute.xlu0 1
        %320 = vperm.xlu0 %319, %v301
        %v321 = vpop.permute.xlu0 %320
        %v322 = vrot.slane %v321, 7
        %v324 = vsub.f32 %v199, %v322
        %325 = vset.pattern.permute.xlu0 2
        %326 = vperm.xlu0 %325, %v301
        %v327 = vpop.permute.xlu0 %326
        %v328 = vrot.slane %v327, 6
        %v330 = vsub.f32 %v199, %v328
        %v331 = vmul.f32 %v318, %v318
        %v332 = vmul.f32 %v324, %v324
        %v334 = vrot.slane %v332, 1
        %v336 = vadd.f32 %v331, %v334
        %v337 = vmul.f32 %v330, %v330
        %v339 = vrot.slane %v337, 2
        %v341 = vadd.f32 %v336, %v339
        %v342 = vmin.f32 %v228, %v341
        %vm343 = vcmask 1040384
        %v344 = vsel %vm343, %v342, -inf
        %345 = vmax.xlane.f32.xlu0 %v344
        %v346 = vpop.xlane.xlu0 %345
        %vm347 = vcmp.ge.f32.partialorder %v342, %v346
        %v348 = vsel %vm347, %v217, 128
        %v349 = vsel %vm343, %v348, 2147483647
        %v350 = vand.u32 %v349, 65535
        %v351 = vshra.s32 %v349, 16
        %v352 = vcvt.s32.f32 %v350
        %v353 = vcvt.s32.f32 %v351
        %354 = vmin.xlane.f32.xlu0 %v353
        %v355 = vpop.xlane.xlu0 %354
        %vm356 = vcmp.eq.f32.partialorder %v353, %v355
        %v357 = vsel %vm356, %v352, inf
        %358 = vmin.xlane.f32.xlu0 %v357
        %v359 = vpop.xlane.xlu0 %358
        %v360 = vcvt.f32.s32 %v359
        %v361 = vcvt.f32.s32 %v355
        %v362 = vshll.u32 %v361, 16
        %v363 = vadd.s32 %v362, %v360
      $region33: #{tpu_custom_call.1} parent=27 // loop_footer
        %s227 = sadd.s32 1, %s223
      $region34: #{tpu_custom_call.1} parent=27 // loop_footer_branch
        %222 = sbr.rel target = $region30
      $region35: #{tpu_custom_call.1} parent=27 // loop_exit
        _
      %vm364 = vcmask 23552
      %365 = vst.msk [vmem:[%s198] sm:$0xff] %vm364, %v230
      %v366 = vsel %vm364, %v230, 0.0
      %368 = vset.pattern.permute.xlu0 0
      %369 = vperm.xlu0 %368, %v230
      %v370 = vpop.permute.xlu0 %369
      %v372 = vlaneseq
      %v373 = vshrl.u32 %v372, 7
      %v374 = vsub.s32 0, %v373
      %v375 = vrot.slane %v199, %v374
      %v376 = vsub.f32 %v370, %v375
      %v377 = vmul.f32 %v376, %v376
      %v378 = vadd.f32 %v377, 0.0
      %379 = vset.pattern.permute.xlu0 1
      %380 = vperm.xlu0 %379, %v230
      %v381 = vpop.permute.xlu0 %380
      %v383 = vlaneseq
      %v384 = vshrl.u32 %v383, 7
      %v385 = vsub.s32 1, %v384
      %v386 = vrot.slane %v199, %v385
      %v387 = vsub.f32 %v381, %v386
      %v388 = vmul.f32 %v387, %v387
      %v389 = vadd.f32 %v378, %v388
      %390 = vset.pattern.permute.xlu0 2
      %391 = vperm.xlu0 %390, %v230
      %v392 = vpop.permute.xlu0 %391
      %v394 = vlaneseq
      %v395 = vshrl.u32 %v394, 7
      %v396 = vsub.s32 2, %v395
      %v397 = vrot.slane %v199, %v396
      %v398 = vsub.f32 %v392, %v397
      %v399 = vmul.f32 %v398, %v398
      %v400 = vadd.f32 %v389, %v399
      %401 = vmin.xlane.f32.xlu0 %v400
      %v402 = vpop.xlane.xlu0 %401
      %vm403 = vcmp.le.f32.partialorder %v400, %v402
      %v404 = vsel %vm403, %v217, 128
      %v405 = vand.u32 %v404, 65535
      %v406 = vshra.s32 %v404, 16
      %v407 = vcvt.s32.f32 %v405
      %v408 = vcvt.s32.f32 %v406
      %409 = vmin.xlane.f32.xlu0 %v408
      %v410 = vpop.xlane.xlu0 %409
      %vm411 = vcmp.eq.f32.partialorder %v408, %v410
      %v412 = vsel %vm411, %v407, inf
      %413 = vmin.xlane.f32.xlu0 %v412
      %v414 = vpop.xlane.xlu0 %413
      %v415 = vcvt.f32.s32 %v414
      %v416 = vcvt.f32.s32 %v410
      %v417 = vshll.u32 %v416, 16
      %v418 = vadd.s32 %v417, %v415
      %vm419 = vcmp.eq.s32.totalorder %v217, %v418
      %v420 = vsel %vm419, 1, 0
      %v421 = vcvt.s32.f32 %v420
      %422 = vmatprep.subr.mxu0 0.0
      %423 = vmatpush1.msra.mxu0 %v200
      %424 = vmatprep.subr.mxu0 0.0
      %425 = vmatpush1.msra.mxu0 %v201
      %426 = vmatprep.subr.mxu0 0.0
      %427 = vmatpush1.msra.mxu0 %v202
      %428 = vmatprep.subr.mxu0 0.0
      %429 = vmatpush1.msra.mxu0 %v203
      %430 = vmatprep.subr.mxu0 0.0
      %431 = vmatpush1.msra.mxu0 %v204
      %432 = vmatprep.subr.mxu0 0.0
      %433 = vmatpush1.msra.mxu0 %v205
      %434 = vmatprep.subr.mxu0 0.0
      %435 = vmatpush1.msra.mxu0 %v206
      %436 = vmatprep.subr.mxu0 0.0
      %437 = vmatpush1.msra.mxu0 %v207
      %438 = vmatprep.subr.mxu0 0.0
      %439 = vmatpush1.msra.mxu0 %v208
      %440 = vmatprep.subr.mxu0 0.0
      %441 = vmatpush1.msra.mxu0 %v209
      %442 = vmatprep.subr.mxu0 0.0
      %443 = vmatpush1.msra.mxu0 %v210
      %444 = vmatprep.subr.mxu0 0.0
      %445 = vmatpush1.msra.mxu0 %v211
      %446 = vmatprep.subr.mxu0 0.0
      %447 = vmatpush1.msra.mxu0 %v212
      %448 = vmatprep.subr.mxu0 0.0
      %449 = vmatpush1.msra.mxu0 %v213
      %450 = vmatprep.subr.mxu0 0.0
      %451 = vmatpush1.msra.mxu0 %v214
      %452 = vmatprep.subr.mxu0 0.0
      %453 = vmatpush1.msra.mxu0 %v215
      %454 = vmatprep.subr.mxu0 0.0
      %455 = vmatpush1.msra.mxu0 0.0
      %456 = vmatprep.subr.mxu0 0.0
      %457 = vmatpush1.msra.mxu0 0.0
      %458 = vmatprep.subr.mxu0 0.0
      %459 = vmatpush1.msra.mxu0 0.0
      %460 = vmatprep.subr.mxu0 0.0
      %461 = vmatpush1.msra.mxu0 0.0
      %462 = vmatprep.subr.mxu0 0.0
      %463 = vmatpush1.msra.mxu0 0.0
      %464 = vmatprep.subr.mxu0 0.0
      %465 = vmatpush1.msra.mxu0 0.0
      %466 = vmatprep.subr.mxu0 0.0
      %467 = vmatpush1.msra.mxu0 0.0
      %468 = vmatprep.subr.mxu0 0.0
      %469 = vmatpush1.msra.mxu0 0.0
      %470 = vmatprep.subr.mxu0 0.0
      %471 = vmatpush1.msra.mxu0 0.0
      %472 = vmatprep.subr.mxu0 0.0
      %473 = vmatpush1.msra.mxu0 0.0
      %474 = vmatprep.subr.mxu0 0.0
      %475 = vmatpush1.msra.mxu0 0.0
      %476 = vmatprep.subr.mxu0 0.0
      %477 = vmatpush1.msra.mxu0 0.0
      %478 = vmatprep.subr.mxu0 0.0
      %479 = vmatpush1.msra.mxu0 0.0
      %480 = vmatprep.subr.mxu0 0.0
      %481 = vmatpush1.msra.mxu0 0.0
      %482 = vmatprep.subr.mxu0 0.0
      %483 = vmatpush1.msra.mxu0 0.0
      %484 = vmatprep.subr.mxu0 0.0
      %485 = vmatpush1.msra.mxu0 0.0
      %486 = vmatprep.mubr.f32.mxu0 0.0
      %487 = vmatmul.mubr.f32.gmra.mrb[0].mxu0 %v421
      %v488 = vpop.f32.mrb[0].mxu0
      %v489 = vadd.f32 0.0, %v488
      %v490 = vpop.f32.mrb[0].mxu0
      %491 = vdwg.mxu0
      %v492 = vsub.f32 %v489, %v366
      %vm493 = vcmask 48128
      %494 = vst.msk [vmem:[%s194] sm:$0xff] %vm493, %v492
      %v495 = vsel %vm419, 1e+30, %v400
      %496 = vmin.xlane.f32.xlu0 %v495
      %v497 = vpop.xlane.xlu0 %496
      %vm498 = vcmp.le.f32.partialorder %v495, %v497
      %v499 = vsel %vm498, %v217, 128
      %v500 = vand.u32 %v499, 65535
      %v501 = vshra.s32 %v499, 16
      %v502 = vcvt.s32.f32 %v500
      %v503 = vcvt.s32.f32 %v501
      %504 = vmin.xlane.f32.xlu0 %v503
      %v505 = vpop.xlane.xlu0 %504
      %vm506 = vcmp.eq.f32.partialorder %v503, %v505
      %v507 = vsel %vm506, %v502, inf
      %508 = vmin.xlane.f32.xlu0 %v507
      %v509 = vpop.xlane.xlu0 %508
      %v510 = vcvt.f32.s32 %v509
      %v511 = vcvt.f32.s32 %v505
      %v512 = vshll.u32 %v511, 16
      %v513 = vadd.s32 %v512, %v510
      %vm514 = vcmp.eq.s32.totalorder %v217, %v513
      %v515 = vsel %vm514, 1, 0
      %v516 = vcvt.s32.f32 %v515
      %517 = vmatprep.subr.mxu0 0.0
      %518 = vmatpush1.msra.mxu0 %v200
      %519 = vmatprep.subr.mxu0 0.0
      %520 = vmatpush1.msra.mxu0 %v201
      %521 = vmatprep.subr.mxu0 0.0
      %522 = vmatpush1.msra.mxu0 %v202
      %523 = vmatprep.subr.mxu0 0.0
      %524 = vmatpush1.msra.mxu0 %v203
      %525 = vmatprep.subr.mxu0 0.0
      %526 = vmatpush1.msra.mxu0 %v204
      %527 = vmatprep.subr.mxu0 0.0
      %528 = vmatpush1.msra.mxu0 %v205
      %529 = vmatprep.subr.mxu0 0.0
      %530 = vmatpush1.msra.mxu0 %v206
      %531 = vmatprep.subr.mxu0 0.0
      %532 = vmatpush1.msra.mxu0 %v207
      %533 = vmatprep.subr.mxu0 0.0
      %534 = vmatpush1.msra.mxu0 %v208
      %535 = vmatprep.subr.mxu0 0.0
      %536 = vmatpush1.msra.mxu0 %v209
      %537 = vmatprep.subr.mxu0 0.0
      %538 = vmatpush1.msra.mxu0 %v210
      %539 = vmatprep.subr.mxu0 0.0
      %540 = vmatpush1.msra.mxu0 %v211
      %541 = vmatprep.subr.mxu0 0.0
      %542 = vmatpush1.msra.mxu0 %v212
      %543 = vmatprep.subr.mxu0 0.0
      %544 = vmatpush1.msra.mxu0 %v213
      %545 = vmatprep.subr.mxu0 0.0
      %546 = vmatpush1.msra.mxu0 %v214
      %547 = vmatprep.subr.mxu0 0.0
      %548 = vmatpush1.msra.mxu0 %v215
      %549 = vmatprep.subr.mxu0 0.0
      %550 = vmatpush1.msra.mxu0 0.0
      %551 = vmatprep.subr.mxu0 0.0
      %552 = vmatpush1.msra.mxu0 0.0
      %553 = vmatprep.subr.mxu0 0.0
      %554 = vmatpush1.msra.mxu0 0.0
      %555 = vmatprep.subr.mxu0 0.0
      %556 = vmatpush1.msra.mxu0 0.0
      %557 = vmatprep.subr.mxu0 0.0
      %558 = vmatpush1.msra.mxu0 0.0
      %559 = vmatprep.subr.mxu0 0.0
      %560 = vmatpush1.msra.mxu0 0.0
      %561 = vmatprep.subr.mxu0 0.0
      %562 = vmatpush1.msra.mxu0 0.0
      %563 = vmatprep.subr.mxu0 0.0
      %564 = vmatpush1.msra.mxu0 0.0
      %565 = vmatprep.subr.mxu0 0.0
      %566 = vmatpush1.msra.mxu0 0.0
      %567 = vmatprep.subr.mxu0 0.0
      %568 = vmatpush1.msra.mxu0 0.0
      %569 = vmatprep.subr.mxu0 0.0
      %570 = vmatpush1.msra.mxu0 0.0
      %571 = vmatprep.subr.mxu0 0.0
      %572 = vmatpush1.msra.mxu0 0.0
      %573 = vmatprep.subr.mxu0 0.0
      %574 = vmatpush1.msra.mxu0 0.0
      %575 = vmatprep.subr.mxu0 0.0
      %576 = vmatpush1.msra.mxu0 0.0
      %577 = vmatprep.subr.mxu0 0.0
      %578 = vmatpush1.msra.mxu0 0.0
      %579 = vmatprep.subr.mxu0 0.0
      %580 = vmatpush1.msra.mxu0 0.0
      %581 = vmatprep.mubr.f32.mxu0 0.0
      %582 = vmatmul.mubr.f32.gmra.mrb[0].mxu0 %v516
      %v583 = vpop.f32.mrb[0].mxu0
      %v584 = vadd.f32 0.0, %v583
      %v585 = vpop.f32.mrb[0].mxu0
      %586 = vdwg.mxu0
      %v587 = vsub.f32 %v584, %v366
      %s588 = scalar_lea.vmem %s194, 8
      %589 = vst.msk [vmem:[%s588] sm:$0xff] %vm493, %v587
      %v590 = vsel %vm514, 1e+30, %v495
      %591 = vmin.xlane.f32.xlu0 %v590
      %v592 = vpop.xlane.xlu0 %591
      %vm593 = vcmp.le.f32.partialorder %v590, %v592
      %v594 = vsel %vm593, %v217, 128
      %v595 = vand.u32 %v594, 65535
      %v596 = vshra.s32 %v594, 16
      %v597 = vcvt.s32.f32 %v595
      %v598 = vcvt.s32.f32 %v596
      %599 = vmin.xlane.f32.xlu0 %v598
      %v600 = vpop.xlane.xlu0 %599
      %vm601 = vcmp.eq.f32.partialorder %v598, %v600
      %v602 = vsel %vm601, %v597, inf
      %603 = vmin.xlane.f32.xlu0 %v602
      %v604 = vpop.xlane.xlu0 %603
      %v605 = vcvt.f32.s32 %v604
      %v606 = vcvt.f32.s32 %v600
      %v607 = vshll.u32 %v606, 16
      %v608 = vadd.s32 %v607, %v605
      %vm609 = vcmp.eq.s32.totalorder %v217, %v608
      %v610 = vsel %vm609, 1, 0
      %v611 = vcvt.s32.f32 %v610
      %612 = vmatprep.subr.mxu0 0.0
      %613 = vmatpush1.msra.mxu0 %v200
      %614 = vmatprep.subr.mxu0 0.0
      %615 = vmatpush1.msra.mxu0 %v201
      %616 = vmatprep.subr.mxu0 0.0
      %617 = vmatpush1.msra.mxu0 %v202
      %618 = vmatprep.subr.mxu0 0.0
      %619 = vmatpush1.msra.mxu0 %v203
      %620 = vmatprep.subr.mxu0 0.0
      %621 = vmatpush1.msra.mxu0 %v204
      %622 = vmatprep.subr.mxu0 0.0
      %623 = vmatpush1.msra.mxu0 %v205
      %624 = vmatprep.subr.mxu0 0.0
      %625 = vmatpush1.msra.mxu0 %v206
      %626 = vmatprep.subr.mxu0 0.0
      %627 = vmatpush1.msra.mxu0 %v207
      %628 = vmatprep.subr.mxu0 0.0
      %629 = vmatpush1.msra.mxu0 %v208
      %630 = vmatprep.subr.mxu0 0.0
      %631 = vmatpush1.msra.mxu0 %v209
      %632 = vmatprep.subr.mxu0 0.0
      %633 = vmatpush1.msra.mxu0 %v210
      %634 = vmatprep.subr.mxu0 0.0
      %635 = vmatpush1.msra.mxu0 %v211
      %636 = vmatprep.subr.mxu0 0.0
      %637 = vmatpush1.msra.mxu0 %v212
      %638 = vmatprep.subr.mxu0 0.0
      %639 = vmatpush1.msra.mxu0 %v213
      %640 = vmatprep.subr.mxu0 0.0
      %641 = vmatpush1.msra.mxu0 %v214
      %642 = vmatprep.subr.mxu0 0.0
      %643 = vmatpush1.msra.mxu0 %v215
      %644 = vmatprep.subr.mxu0 0.0
      %645 = vmatpush1.msra.mxu0 0.0
      %646 = vmatprep.subr.mxu0 0.0
      %647 = vmatpush1.msra.mxu0 0.0
      %648 = vmatprep.subr.mxu0 0.0
      %649 = vmatpush1.msra.mxu0 0.0
      %650 = vmatprep.subr.mxu0 0.0
      %651 = vmatpush1.msra.mxu0 0.0
      %652 = vmatprep.subr.mxu0 0.0
      %653 = vmatpush1.msra.mxu0 0.0
      %654 = vmatprep.subr.mxu0 0.0
      %655 = vmatpush1.msra.mxu0 0.0
      %656 = vmatprep.subr.mxu0 0.0
      %657 = vmatpush1.msra.mxu0 0.0
      %658 = vmatprep.subr.mxu0 0.0
      %659 = vmatpush1.msra.mxu0 0.0
      %660 = vmatprep.subr.mxu0 0.0
      %661 = vmatpush1.msra.mxu0 0.0
      %662 = vmatprep.subr.mxu0 0.0
      %663 = vmatpush1.msra.mxu0 0.0
      %664 = vmatprep.subr.mxu0 0.0
      %665 = vmatpush1.msra.mxu0 0.0
      %666 = vmatprep.subr.mxu0 0.0
      %667 = vmatpush1.msra.mxu0 0.0
      %668 = vmatprep.subr.mxu0 0.0
      %669 = vmatpush1.msra.mxu0 0.0
      %670 = vmatprep.subr.mxu0 0.0
      %671 = vmatpush1.msra.mxu0 0.0
      %672 = vmatprep.subr.mxu0 0.0
      %673 = vmatpush1.msra.mxu0 0.0
      %674 = vmatprep.subr.mxu0 0.0
      %675 = vmatpush1.msra.mxu0 0.0
      %676 = vmatprep.mubr.f32.mxu0 0.0
      %677 = vmatmul.mubr.f32.gmra.mrb[0].mxu0 %v611
      %v678 = vpop.f32.mrb[0].mxu0
      %v679 = vadd.f32 0.0, %v678
      %v680 = vpop.f32.mrb[0].mxu0
      %681 = vdwg.mxu0
      %v682 = vsub.f32 %v679, %v366
      %s683 = scalar_lea.vmem %s194, 16
      %684 = vst.msk [vmem:[%s683] sm:$0xff] %vm493, %v682
      %v685 = vsel %vm609, 1e+30, %v590
      %686 = vmin.xlane.f32.xlu0 %v685
      %v687 = vpop.xlane.xlu0 %686
      %vm688 = vcmp.le.f32.partialorder %v685, %v687
      %v689 = vsel %vm688, %v217, 128
      %v690 = vand.u32 %v689, 65535
      %v691 = vshra.s32 %v689, 16
      %v692 = vcvt.s32.f32 %v690
      %v693 = vcvt.s32.f32 %v691
      %694 = vmin.xlane.f32.xlu0 %v693
      %v695 = vpop.xlane.xlu0 %694
      %vm696 = vcmp.eq.f32.partialorder %v693, %v695
      %v697 = vsel %vm696, %v692, inf
      %698 = vmin.xlane.f32.xlu0 %v697
      %v699 = vpop.xlane.xlu0 %698
      %v700 = vcvt.f32.s32 %v699
      %v701 = vcvt.f32.s32 %v695
      %v702 = vshll.u32 %v701, 16
      %v703 = vadd.s32 %v702, %v700
      %vm704 = vcmp.eq.s32.totalorder %v217, %v703
      %v705 = vsel %vm704, 1, 0
      %v706 = vcvt.s32.f32 %v705
      %707 = vmatprep.subr.mxu0 0.0
      %708 = vmatpush1.msra.mxu0 %v200
      %709 = vmatprep.subr.mxu0 0.0
      %710 = vmatpush1.msra.mxu0 %v201
      %711 = vmatprep.subr.mxu0 0.0
      %712 = vmatpush1.msra.mxu0 %v202
      %713 = vmatprep.subr.mxu0 0.0
      %714 = vmatpush1.msra.mxu0 %v203
      %715 = vmatprep.subr.mxu0 0.0
      %716 = vmatpush1.msra.mxu0 %v204
      %717 = vmatprep.subr.mxu0 0.0
      %718 = vmatpush1.msra.mxu0 %v205
      %719 = vmatprep.subr.mxu0 0.0
      %720 = vmatpush1.msra.mxu0 %v206
      %721 = vmatprep.subr.mxu0 0.0
      %722 = vmatpush1.msra.mxu0 %v207
      %723 = vmatprep.subr.mxu0 0.0
      %724 = vmatpush1.msra.mxu0 %v208
      %725 = vmatprep.subr.mxu0 0.0
      %726 = vmatpush1.msra.mxu0 %v209
      %727 = vmatprep.subr.mxu0 0.0
      %728 = vmatpush1.msra.mxu0 %v210
      %729 = vmatprep.subr.mxu0 0.0
      %730 = vmatpush1.msra.mxu0 %v211
      %731 = vmatprep.subr.mxu0 0.0
      %732 = vmatpush1.msra.mxu0 %v212
      %733 = vmatprep.subr.mxu0 0.0
      %734 = vmatpush1.msra.mxu0 %v213
      %735 = vmatprep.subr.mxu0 0.0
      %736 = vmatpush1.msra.mxu0 %v214
      %737 = vmatprep.subr.mxu0 0.0
      %738 = vmatpush1.msra.mxu0 %v215
      %739 = vmatprep.subr.mxu0 0.0
      %740 = vmatpush1.msra.mxu0 0.0
      %741 = vmatprep.subr.mxu0 0.0
      %742 = vmatpush1.msra.mxu0 0.0
      %743 = vmatprep.subr.mxu0 0.0
      %744 = vmatpush1.msra.mxu0 0.0
      %745 = vmatprep.subr.mxu0 0.0
      %746 = vmatpush1.msra.mxu0 0.0
      %747 = vmatprep.subr.mxu0 0.0
      %748 = vmatpush1.msra.mxu0 0.0
      %749 = vmatprep.subr.mxu0 0.0
      %750 = vmatpush1.msra.mxu0 0.0
      %751 = vmatprep.subr.mxu0 0.0
      %752 = vmatpush1.msra.mxu0 0.0
      %753 = vmatprep.subr.mxu0 0.0
      %754 = vmatpush1.msra.mxu0 0.0
      %755 = vmatprep.subr.mxu0 0.0
      %756 = vmatpush1.msra.mxu0 0.0
      %757 = vmatprep.subr.mxu0 0.0
      %758 = vmatpush1.msra.mxu0 0.0
      %759 = vmatprep.subr.mxu0 0.0
      %760 = vmatpush1.msra.mxu0 0.0
      %761 = vmatprep.subr.mxu0 0.0
      %762 = vmatpush1.msra.mxu0 0.0
      %763 = vmatprep.subr.mxu0 0.0
      %764 = vmatpush1.msra.mxu0 0.0
      %765 = vmatprep.subr.mxu0 0.0
      %766 = vmatpush1.msra.mxu0 0.0
      %767 = vmatprep.subr.mxu0 0.0
      %768 = vmatpush1.msra.mxu0 0.0
      %769 = vmatprep.subr.mxu0 0.0
      %770 = vmatpush1.msra.mxu0 0.0
      %771 = vmatprep.mubr.f32.mxu0 0.0
      %772 = vmatmul.mubr.f32.gmra.mrb[0].mxu0 %v706
      %v773 = vpop.f32.mrb[0].mxu0
      %v774 = vadd.f32 0.0, %v773
      %v775 = vpop.f32.mrb[0].mxu0
      %776 = vdwg.mxu0
      %v777 = vsub.f32 %v774, %v366
      %s778 = scalar_lea.vmem %s194, 24
      %779 = vst.msk [vmem:[%s778] sm:$0xff] %vm493, %v777
      %v780 = vsel %vm704, 1e+30, %v685
      %781 = vmin.xlane.f32.xlu0 %v780
      %v782 = vpop.xlane.xlu0 %781
      %vm783 = vcmp.le.f32.partialorder %v780, %v782
      %v784 = vsel %vm783, %v217, 128
      %v785 = vand.u32 %v784, 65535
      %v786 = vshra.s32 %v784, 16
      %v787 = vcvt.s32.f32 %v785
      %v788 = vcvt.s32.f32 %v786
      %789 = vmin.xlane.f32.xlu0 %v788
      %v790 = vpop.xlane.xlu0 %789
      %vm791 = vcmp.eq.f32.partialorder %v788, %v790
      %v792 = vsel %vm791, %v787, inf
      %793 = vmin.xlane.f32.xlu0 %v792
      %v794 = vpop.xlane.xlu0 %793
      %v795 = vcvt.f32.s32 %v794
      %v796 = vcvt.f32.s32 %v790
      %v797 = vshll.u32 %v796, 16
      %v798 = vadd.s32 %v797, %v795
      %vm799 = vcmp.eq.s32.totalorder %v217, %v798
      %v800 = vsel %vm799, 1, 0
      %v801 = vcvt.s32.f32 %v800
      %802 = vmatprep.subr.mxu0 0.0
      %803 = vmatpush1.msra.mxu0 %v200
      %804 = vmatprep.subr.mxu0 0.0
      %805 = vmatpush1.msra.mxu0 %v201
      %806 = vmatprep.subr.mxu0 0.0
      %807 = vmatpush1.msra.mxu0 %v202
      %808 = vmatprep.subr.mxu0 0.0
      %809 = vmatpush1.msra.mxu0 %v203
      %810 = vmatprep.subr.mxu0 0.0
      %811 = vmatpush1.msra.mxu0 %v204
      %812 = vmatprep.subr.mxu0 0.0
      %813 = vmatpush1.msra.mxu0 %v205
      %814 = vmatprep.subr.mxu0 0.0
      %815 = vmatpush1.msra.mxu0 %v206
      %816 = vmatprep.subr.mxu0 0.0
      %817 = vmatpush1.msra.mxu0 %v207
      %818 = vmatprep.subr.mxu0 0.0
      %819 = vmatpush1.msra.mxu0 %v208
      %820 = vmatprep.subr.mxu0 0.0
      %821 = vmatpush1.msra.mxu0 %v209
      %822 = vmatprep.subr.mxu0 0.0
      %823 = vmatpush1.msra.mxu0 %v210
      %824 = vmatprep.subr.mxu0 0.0
      %825 = vmatpush1.msra.mxu0 %v211
      %826 = vmatprep.subr.mxu0 0.0
      %827 = vmatpush1.msra.mxu0 %v212
      %828 = vmatprep.subr.mxu0 0.0
      %829 = vmatpush1.msra.mxu0 %v213
      %830 = vmatprep.subr.mxu0 0.0
      %831 = vmatpush1.msra.mxu0 %v214
      %832 = vmatprep.subr.mxu0 0.0
      %833 = vmatpush1.msra.mxu0 %v215
      %834 = vmatprep.subr.mxu0 0.0
      %835 = vmatpush1.msra.mxu0 0.0
      %836 = vmatprep.subr.mxu0 0.0
      %837 = vmatpush1.msra.mxu0 0.0
      %838 = vmatprep.subr.mxu0 0.0
      %839 = vmatpush1.msra.mxu0 0.0
      %840 = vmatprep.subr.mxu0 0.0
      %841 = vmatpush1.msra.mxu0 0.0
      %842 = vmatprep.subr.mxu0 0.0
      %843 = vmatpush1.msra.mxu0 0.0
      %844 = vmatprep.subr.mxu0 0.0
      %845 = vmatpush1.msra.mxu0 0.0
      %846 = vmatprep.subr.mxu0 0.0
      %847 = vmatpush1.msra.mxu0 0.0
      %848 = vmatprep.subr.mxu0 0.0
      %849 = vmatpush1.msra.mxu0 0.0
      %850 = vmatprep.subr.mxu0 0.0
      %851 = vmatpush1.msra.mxu0 0.0
      %852 = vmatprep.subr.mxu0 0.0
      %853 = vmatpush1.msra.mxu0 0.0
      %854 = vmatprep.subr.mxu0 0.0
      %855 = vmatpush1.msra.mxu0 0.0
      %856 = vmatprep.subr.mxu0 0.0
      %857 = vmatpush1.msra.mxu0 0.0
      %858 = vmatprep.subr.mxu0 0.0
      %859 = vmatpush1.msra.mxu0 0.0
      %860 = vmatprep.subr.mxu0 0.0
      %861 = vmatpush1.msra.mxu0 0.0
      %862 = vmatprep.subr.mxu0 0.0
      %863 = vmatpush1.msra.mxu0 0.0
      %864 = vmatprep.subr.mxu0 0.0
      %865 = vmatpush1.msra.mxu0 0.0
      %866 = vmatprep.mubr.f32.mxu0 0.0
      %867 = vmatmul.mubr.f32.gmra.mrb[0].mxu0 %v801
      %v868 = vpop.f32.mrb[0].mxu0
      %v869 = vadd.f32 0.0, %v868
      %v870 = vpop.f32.mrb[0].mxu0
      %871 = vdwg.mxu0
      %v872 = vsub.f32 %v869, %v366
      %s873 = scalar_lea.vmem %s194, 32
      %874 = vst.msk [vmem:[%s873] sm:$0xff] %vm493, %v872
      %v875 = vsel %vm799, 1e+30, %v780
      %876 = vmin.xlane.f32.xlu0 %v875
      %v877 = vpop.xlane.xlu0 %876
      %vm878 = vcmp.le.f32.partialorder %v875, %v877
      %v879 = vsel %vm878, %v217, 128
      %v880 = vand.u32 %v879, 65535
      %v881 = vshra.s32 %v879, 16
      %v882 = vcvt.s32.f32 %v880
      %v883 = vcvt.s32.f32 %v881
      %884 = vmin.xlane.f32.xlu0 %v883
      %v885 = vpop.xlane.xlu0 %884
      %vm886 = vcmp.eq.f32.partialorder %v883, %v885
      %v887 = vsel %vm886, %v882, inf
      %888 = vmin.xlane.f32.xlu0 %v887
      %v889 = vpop.xlane.xlu0 %888
      %v890 = vcvt.f32.s32 %v889
      %v891 = vcvt.f32.s32 %v885
      %v892 = vshll.u32 %v891, 16
      %v893 = vadd.s32 %v892, %v890
      %vm894 = vcmp.eq.s32.totalorder %v217, %v893
      %v895 = vsel %vm894, 1, 0
      %v896 = vcvt.s32.f32 %v895
      %897 = vmatprep.subr.mxu0 0.0
      %898 = vmatpush1.msra.mxu0 %v200
      %899 = vmatprep.subr.mxu0 0.0
      %900 = vmatpush1.msra.mxu0 %v201
      %901 = vmatprep.subr.mxu0 0.0
      %902 = vmatpush1.msra.mxu0 %v202
      %903 = vmatprep.subr.mxu0 0.0
      %904 = vmatpush1.msra.mxu0 %v203
      %905 = vmatprep.subr.mxu0 0.0
      %906 = vmatpush1.msra.mxu0 %v204
      %907 = vmatprep.subr.mxu0 0.0
      %908 = vmatpush1.msra.mxu0 %v205
      %909 = vmatprep.subr.mxu0 0.0
      %910 = vmatpush1.msra.mxu0 %v206
      %911 = vmatprep.subr.mxu0 0.0
      %912 = vmatpush1.msra.mxu0 %v207
      %913 = vmatprep.subr.mxu0 0.0
      %914 = vmatpush1.msra.mxu0 %v208
      %915 = vmatprep.subr.mxu0 0.0
      %916 = vmatpush1.msra.mxu0 %v209
      %917 = vmatprep.subr.mxu0 0.0
      %918 = vmatpush1.msra.mxu0 %v210
      %919 = vmatprep.subr.mxu0 0.0
      %920 = vmatpush1.msra.mxu0 %v211
      %921 = vmatprep.subr.mxu0 0.0
      %922 = vmatpush1.msra.mxu0 %v212
      %923 = vmatprep.subr.mxu0 0.0
      %924 = vmatpush1.msra.mxu0 %v213
      %925 = vmatprep.subr.mxu0 0.0
      %926 = vmatpush1.msra.mxu0 %v214
      %927 = vmatprep.subr.mxu0 0.0
      %928 = vmatpush1.msra.mxu0 %v215
      %929 = vmatprep.subr.mxu0 0.0
      %930 = vmatpush1.msra.mxu0 0.0
      %931 = vmatprep.subr.mxu0 0.0
      %932 = vmatpush1.msra.mxu0 0.0
      %933 = vmatprep.subr.mxu0 0.0
      %934 = vmatpush1.msra.mxu0 0.0
      %935 = vmatprep.subr.mxu0 0.0
      %936 = vmatpush1.msra.mxu0 0.0
      %937 = vmatprep.subr.mxu0 0.0
      %938 = vmatpush1.msra.mxu0 0.0
      %939 = vmatprep.subr.mxu0 0.0
      %940 = vmatpush1.msra.mxu0 0.0
      %941 = vmatprep.subr.mxu0 0.0
      %942 = vmatpush1.msra.mxu0 0.0
      %943 = vmatprep.subr.mxu0 0.0
      %944 = vmatpush1.msra.mxu0 0.0
      %945 = vmatprep.subr.mxu0 0.0
      %946 = vmatpush1.msra.mxu0 0.0
      %947 = vmatprep.subr.mxu0 0.0
      %948 = vmatpush1.msra.mxu0 0.0
      %949 = vmatprep.subr.mxu0 0.0
      %950 = vmatpush1.msra.mxu0 0.0
      %951 = vmatprep.subr.mxu0 0.0
      %952 = vmatpush1.msra.mxu0 0.0
      %953 = vmatprep.subr.mxu0 0.0
      %954 = vmatpush1.msra.mxu0 0.0
      %955 = vmatprep.subr.mxu0 0.0
      %956 = vmatpush1.msra.mxu0 0.0
      %957 = vmatprep.subr.mxu0 0.0
      %958 = vmatpush1.msra.mxu0 0.0
      %959 = vmatprep.subr.mxu0 0.0
      %960 = vmatpush1.msra.mxu0 0.0
      %961 = vmatprep.mubr.f32.mxu0 0.0
      %962 = vmatmul.mubr.f32.gmra.mrb[0].mxu0 %v896
      %v963 = vpop.f32.mrb[0].mxu0
      %v964 = vadd.f32 0.0, %v963
      %v965 = vpop.f32.mrb[0].mxu0
      %966 = vdwg.mxu0
      %v967 = vsub.f32 %v964, %v366
      %s968 = scalar_lea.vmem %s194, 40
      %969 = vst.msk [vmem:[%s968] sm:$0xff] %vm493, %v967
      %v970 = vsel %vm894, 1e+30, %v875
      %971 = vmin.xlane.f32.xlu0 %v970
      %v972 = vpop.xlane.xlu0 %971
      %vm973 = vcmp.le.f32.partialorder %v970, %v972
      %v974 = vsel %vm973, %v217, 128
      %v975 = vand.u32 %v974, 65535
      %v976 = vshra.s32 %v974, 16
      %v977 = vcvt.s32.f32 %v975
      %v978 = vcvt.s32.f32 %v976
      %979 = vmin.xlane.f32.xlu0 %v978
      %v980 = vpop.xlane.xlu0 %979
      %vm981 = vcmp.eq.f32.partialorder %v978, %v980
      %v982 = vsel %vm981, %v977, inf
      %983 = vmin.xlane.f32.xlu0 %v982
      %v984 = vpop.xlane.xlu0 %983
      %v985 = vcvt.f32.s32 %v984
      %v986 = vcvt.f32.s32 %v980
      %v987 = vshll.u32 %v986, 16
      %v988 = vadd.s32 %v987, %v985
      %vm989 = vcmp.eq.s32.totalorder %v217, %v988
      %v990 = vsel %vm989, 1, 0
      %v991 = vcvt.s32.f32 %v990
      %992 = vmatprep.subr.mxu0 0.0
      %993 = vmatpush1.msra.mxu0 %v200
      %994 = vmatprep.subr.mxu0 0.0
      %995 = vmatpush1.msra.mxu0 %v201
      %996 = vmatprep.subr.mxu0 0.0
      %997 = vmatpush1.msra.mxu0 %v202
      %998 = vmatprep.subr.mxu0 0.0
      %999 = vmatpush1.msra.mxu0 %v203
      %1000 = vmatprep.subr.mxu0 0.0
      %1001 = vmatpush1.msra.mxu0 %v204
      %1002 = vmatprep.subr.mxu0 0.0
      %1003 = vmatpush1.msra.mxu0 %v205
      %1004 = vmatprep.subr.mxu0 0.0
      %1005 = vmatpush1.msra.mxu0 %v206
      %1006 = vmatprep.subr.mxu0 0.0
      %1007 = vmatpush1.msra.mxu0 %v207
      %1008 = vmatprep.subr.mxu0 0.0
      %1009 = vmatpush1.msra.mxu0 %v208
      %1010 = vmatprep.subr.mxu0 0.0
      %1011 = vmatpush1.msra.mxu0 %v209
      %1012 = vmatprep.subr.mxu0 0.0
      %1013 = vmatpush1.msra.mxu0 %v210
      %1014 = vmatprep.subr.mxu0 0.0
      %1015 = vmatpush1.msra.mxu0 %v211
      %1016 = vmatprep.subr.mxu0 0.0
      %1017 = vmatpush1.msra.mxu0 %v212
      %1018 = vmatprep.subr.mxu0 0.0
      %1019 = vmatpush1.msra.mxu0 %v213
      %1020 = vmatprep.subr.mxu0 0.0
      %1021 = vmatpush1.msra.mxu0 %v214
      %1022 = vmatprep.subr.mxu0 0.0
      %1023 = vmatpush1.msra.mxu0 %v215
      %1024 = vmatprep.subr.mxu0 0.0
      %1025 = vmatpush1.msra.mxu0 0.0
      %1026 = vmatprep.subr.mxu0 0.0
      %1027 = vmatpush1.msra.mxu0 0.0
      %1028 = vmatprep.subr.mxu0 0.0
      %1029 = vmatpush1.msra.mxu0 0.0
      %1030 = vmatprep.subr.mxu0 0.0
      %1031 = vmatpush1.msra.mxu0 0.0
      %1032 = vmatprep.subr.mxu0 0.0
      %1033 = vmatpush1.msra.mxu0 0.0
      %1034 = vmatprep.subr.mxu0 0.0
      %1035 = vmatpush1.msra.mxu0 0.0
      %1036 = vmatprep.subr.mxu0 0.0
      %1037 = vmatpush1.msra.mxu0 0.0
      %1038 = vmatprep.subr.mxu0 0.0
      %1039 = vmatpush1.msra.mxu0 0.0
      %1040 = vmatprep.subr.mxu0 0.0
      %1041 = vmatpush1.msra.mxu0 0.0
      %1042 = vmatprep.subr.mxu0 0.0
      %1043 = vmatpush1.msra.mxu0 0.0
      %1044 = vmatprep.subr.mxu0 0.0
      %1045 = vmatpush1.msra.mxu0 0.0
      %1046 = vmatprep.subr.mxu0 0.0
      %1047 = vmatpush1.msra.mxu0 0.0
      %1048 = vmatprep.subr.mxu0 0.0
      %1049 = vmatpush1.msra.mxu0 0.0
      %1050 = vmatprep.subr.mxu0 0.0
      %1051 = vmatpush1.msra.mxu0 0.0
      %1052 = vmatprep.subr.mxu0 0.0
      %1053 = vmatpush1.msra.mxu0 0.0
      %1054 = vmatprep.subr.mxu0 0.0
      %1055 = vmatpush1.msra.mxu0 0.0
      %1056 = vmatprep.mubr.f32.mxu0 0.0
      %1057 = vmatmul.mubr.f32.gmra.mrb[0].mxu0 %v991
      %v1058 = vpop.f32.mrb[0].mxu0
      %v1059 = vadd.f32 0.0, %v1058
      %v1060 = vpop.f32.mrb[0].mxu0
      %1061 = vdwg.mxu0
      %v1062 = vsub.f32 %v1059, %v366
      %s1063 = scalar_lea.vmem %s194, 48
      %1064 = vst.msk [vmem:[%s1063] sm:$0xff] %vm493, %v1062
      %v1065 = vsel %vm989, 1e+30, %v970
      %1066 = vmin.xlane.f32.xlu0 %v1065
      %v1067 = vpop.xlane.xlu0 %1066
      %vm1068 = vcmp.le.f32.partialorder %v1065, %v1067
      %v1069 = vsel %vm1068, %v217, 128
      %v1070 = vand.u32 %v1069, 65535
      %v1071 = vshra.s32 %v1069, 16
      %v1072 = vcvt.s32.f32 %v1070
      %v1073 = vcvt.s32.f32 %v1071
      %1074 = vmin.xlane.f32.xlu0 %v1073
      %v1075 = vpop.xlane.xlu0 %1074
      %vm1076 = vcmp.eq.f32.partialorder %v1073, %v1075
      %v1077 = vsel %vm1076, %v1072, inf
      %1078 = vmin.xlane.f32.xlu0 %v1077
      %v1079 = vpop.xlane.xlu0 %1078
      %v1080 = vcvt.f32.s32 %v1079
      %v1081 = vcvt.f32.s32 %v1075
      %v1082 = vshll.u32 %v1081, 16
      %v1083 = vadd.s32 %v1082, %v1080
      %vm1084 = vcmp.eq.s32.totalorder %v217, %v1083
      %v1085 = vsel %vm1084, 1, 0
      %v1086 = vcvt.s32.f32 %v1085
      %1087 = vmatprep.subr.mxu0 0.0
      %1088 = vmatpush1.msra.mxu0 %v200
      %1089 = vmatprep.subr.mxu0 0.0
      %1090 = vmatpush1.msra.mxu0 %v201
      %1091 = vmatprep.subr.mxu0 0.0
      %1092 = vmatpush1.msra.mxu0 %v202
      %1093 = vmatprep.subr.mxu0 0.0
      %1094 = vmatpush1.msra.mxu0 %v203
      %1095 = vmatprep.subr.mxu0 0.0
      %1096 = vmatpush1.msra.mxu0 %v204
      %1097 = vmatprep.subr.mxu0 0.0
      %1098 = vmatpush1.msra.mxu0 %v205
      %1099 = vmatprep.subr.mxu0 0.0
      %1100 = vmatpush1.msra.mxu0 %v206
      %1101 = vmatprep.subr.mxu0 0.0
      %1102 = vmatpush1.msra.mxu0 %v207
      %1103 = vmatprep.subr.mxu0 0.0
      %1104 = vmatpush1.msra.mxu0 %v208
      %1105 = vmatprep.subr.mxu0 0.0
      %1106 = vmatpush1.msra.mxu0 %v209
      %1107 = vmatprep.subr.mxu0 0.0
      %1108 = vmatpush1.msra.mxu0 %v210
      %1109 = vmatprep.subr.mxu0 0.0
      %1110 = vmatpush1.msra.mxu0 %v211
      %1111 = vmatprep.subr.mxu0 0.0
      %1112 = vmatpush1.msra.mxu0 %v212
      %1113 = vmatprep.subr.mxu0 0.0
      %1114 = vmatpush1.msra.mxu0 %v213
      %1115 = vmatprep.subr.mxu0 0.0
      %1116 = vmatpush1.msra.mxu0 %v214
      %1117 = vmatprep.subr.mxu0 0.0
      %1118 = vmatpush1.msra.mxu0 %v215
      %1119 = vmatprep.subr.mxu0 0.0
      %1120 = vmatpush1.msra.mxu0 0.0
      %1121 = vmatprep.subr.mxu0 0.0
      %1122 = vmatpush1.msra.mxu0 0.0
      %1123 = vmatprep.subr.mxu0 0.0
      %1124 = vmatpush1.msra.mxu0 0.0
      %1125 = vmatprep.subr.mxu0 0.0
      %1126 = vmatpush1.msra.mxu0 0.0
      %1127 = vmatprep.subr.mxu0 0.0
      %1128 = vmatpush1.msra.mxu0 0.0
      %1129 = vmatprep.subr.mxu0 0.0
      %1130 = vmatpush1.msra.mxu0 0.0
      %1131 = vmatprep.subr.mxu0 0.0
      %1132 = vmatpush1.msra.mxu0 0.0
      %1133 = vmatprep.subr.mxu0 0.0
      %1134 = vmatpush1.msra.mxu0 0.0
      %1135 = vmatprep.subr.mxu0 0.0
      %1136 = vmatpush1.msra.mxu0 0.0
      %1137 = vmatprep.subr.mxu0 0.0
      %1138 = vmatpush1.msra.mxu0 0.0
      %1139 = vmatprep.subr.mxu0 0.0
      %1140 = vmatpush1.msra.mxu0 0.0
      %1141 = vmatprep.subr.mxu0 0.0
      %1142 = vmatpush1.msra.mxu0 0.0
      %1143 = vmatprep.subr.mxu0 0.0
      %1144 = vmatpush1.msra.mxu0 0.0
      %1145 = vmatprep.subr.mxu0 0.0
      %1146 = vmatpush1.msra.mxu0 0.0
      %1147 = vmatprep.subr.mxu0 0.0
      %1148 = vmatpush1.msra.mxu0 0.0
      %1149 = vmatprep.subr.mxu0 0.0
      %1150 = vmatpush1.msra.mxu0 0.0
      %1151 = vmatprep.mubr.f32.mxu0 0.0
      %1152 = vmatmul.mubr.f32.gmra.mrb[0].mxu0 %v1086
      %v1153 = vpop.f32.mrb[0].mxu0
      %v1154 = vadd.f32 0.0, %v1153
      %v1155 = vpop.f32.mrb[0].mxu0
      %1156 = vdwg.mxu0
      %v1157 = vsub.f32 %v1154, %v366
      %s1158 = scalar_lea.vmem %s194, 56
      %1159 = vst.msk [vmem:[%s1158] sm:$0xff] %vm493, %v1157
      %p1160 = scmp.lt.s32.totalorder %s15, 1
      %s1161 = scalar_select %p1160, %s15, 1
      %s1162 = smul.addr %s1161, 8
      %s1163 = smul.addr %s1162, 8
      %s1164 = scalar_lea.vmem %s2, %s1163
      %p1165 = scmp.lt.s32.totalorder %s15, 1
      %s1166 = scalar_select %p1165, %s15, 1
      %s1167 = smul.addr %s1166, 8
      %s1168 = scalar_lea.vmem %s3, %s1167
      // Predicated region
      $region36: #{tpu_custom_call.1} parent=27 // pred_check
        %p1169 = pneg %p85
      $region37: #{tpu_custom_call.1} parent=27 // pred_check_branch
        %1171 = sbr.rel (%p1169) target = $region39
      $region38: #{tpu_custom_call.1} parent=27 // pred_region
        _
      $region39: #{tpu_custom_call.1} parent=27 // pred_fallthru
        _
      // Predicated region
      $region40: #{tpu_custom_call.1} parent=27 // pred_check
        %p1172 = pneg %p111
      $region41: #{tpu_custom_call.1} parent=27 // pred_check_branch
        %1174 = sbr.rel (%p1172) target = $region43
      $region42: #{tpu_custom_call.1} parent=27 // pred_region
        _
      $region43: #{tpu_custom_call.1} parent=27 // pred_fallthru
        _
    $region28: #{tpu_custom_call.1} parent=5 // pred_fallthru
      _
    %p1175 = scmp.le.s32.totalorder 2, %s10
    // Predicated region
    $region44: #{tpu_custom_call.1} parent=5 // pred_check
      %p1176 = pneg %p1175
    $region45: #{tpu_custom_call.1} parent=5 // pred_check_branch
      %1178 = sbr.rel (%p1176) target = $region47
    $region46: #{tpu_custom_call.1} parent=5 // pred_region
      %s1179 = ssub.s32 %s10, 2
      // Predicated region
      $region48: #{tpu_custom_call.1} parent=46 // pred_check
        %p1180 = pneg %p91
      $region49: #{tpu_custom_call.1} parent=46 // pred_check_branch
        %1182 = sbr.rel (%p1180) target = $region51
      $region50: #{tpu_custom_call.1} parent=46 // pred_region
        %p1183 = scmp.lt.s32.totalorder %s16, 1
        %s1184 = scalar_select %p1183, %s16, 1
        %s1185 = smul.addr %s1184, 8
        %s1186 = smul.addr %s1185, 8
        %s1187 = scalar_lea.vmem %s2, %s1186
      $region51: #{tpu_custom_call.1} parent=46 // pred_fallthru
        _
      // Predicated region
      $region52: #{tpu_custom_call.1} parent=46 // pred_check
        %p1188 = pneg %p117
      $region53: #{tpu_custom_call.1} parent=46 // pred_check_branch
        %1190 = sbr.rel (%p1188) target = $region55
      $region54: #{tpu_custom_call.1} parent=46 // pred_region
        %p1191 = scmp.lt.s32.totalorder %s16, 1
        %s1192 = scalar_select %p1191, %s16, 1
        %s1193 = smul.addr %s1192, 8
        %s1194 = scalar_lea.vmem %s3, %s1193
      $region55: #{tpu_custom_call.1} parent=46 // pred_fallthru
        _
    $region47: #{tpu_custom_call.1} parent=5 // pred_fallthru
      _
  $region6: #{tpu_custom_call.1} parent=0 // loop_footer
    %s14 = sadd.s32 1, %s10
  $region7: #{tpu_custom_call.1} parent=0 // loop_footer_branch
    %9 = sbr.rel target = $region3
  $region8: #{tpu_custom_call.1} parent=0 // loop_exit
    _

</llo_original>
